<compile_context>
chip_gen: v6e
topology: v6e:2x2x1
jax: 0.10.0
libtpu: 0.0.40
codegen_flags: <defaults>
</compile_context>

<pallas_src>
import jax
import jax.numpy as jnp
from jax import lax
from jax.experimental import pallas as pl
from jax.experimental.pallas import tpu as pltpu


def outblock_kernel(x_ref, w1_ref, b1_ref, b2_ref, w2_ref, o_ref,
                    xp_ref, catp_ref):
    # x_ref    : (1, Cin, H, W)    VMEM   (unpadded input block)
    # w1_ref   : (3*Cin*9,)        SMEM   (conv1 weight, OIHW flattened)
    # b1_ref   : (3,)              SMEM
    # b2_ref   : (1,)              SMEM
    # w2_ref   : (3*9,)            SMEM   (conv2 weight folded to 3 in-channels)
    # o_ref    : (1, 1, H, W)      VMEM
    # xp_ref   : (Cin, H+2, W+2)   VMEM scratch, zero border == conv1 padding
    # catp_ref : (3,   H+2, W+2)   VMEM scratch, zero border == conv2 padding
    _, cin, H, W = x_ref.shape
    f32 = jnp.float32

    # Zero only the 1-pixel borders (interiors are fully overwritten below).
    for ref, nc in ((xp_ref, cin), (catp_ref, 3)):
        ref[:, 0:1, :] = jnp.zeros((nc, 1, W + 2), f32)
        ref[:, H + 1:H + 2, :] = jnp.zeros((nc, 1, W + 2), f32)
        ref[:, :, 0:1] = jnp.zeros((nc, H + 2, 1), f32)
        ref[:, :, W + 1:W + 2] = jnp.zeros((nc, H + 2, 1), f32)

    # Stage the input into the padded scratch (replaces host-side jnp.pad).
    xp_ref[:, 1:H + 1, 1:W + 1] = x_ref[0]

    # ---- conv1: Cin -> 3, k=3, pad=1 ----
    # Each shifted x slice is loaded once and reused for all 3 output channels.
    acc = [jnp.full((H, W), b1_ref[co], dtype=f32) for co in range(3)]
    for ci in range(cin):
        for kh in range(3):
            for kw in range(3):
                xs = xp_ref[ci, kh:kh + H, kw:kw + W]
                for co in range(3):
                    w = w1_ref[((co * cin + ci) * 3 + kh) * 3 + kw]
                    acc[co] = acc[co] + xs * w
    for co in range(3):
        catp_ref[co, 1:H + 1, 1:W + 1] = acc[co]

    # ---- dropout (identity at eval) + cat + conv2 (6->1), folded to 3->1 ----
    # TODO(synk): training-mode Dropout2d (random channel zeroing + 1/(1-p)
    # rescale) is not implemented; eval-mode identity semantics are used and
    # the w2 channel folding relies on it.
    out = jnp.full((H, W), b2_ref[0], dtype=f32)
    for c in range(3):
        for kh in range(3):
            for kw in range(3):
                w = w2_ref[(c * 3 + kh) * 3 + kw]
                out = out + catp_ref[c, kh:kh + H, kw:kw + W] * w

    o_ref[0, 0] = out


def outblock_pallas(x, w1, b1, w2, b2):
    B, Cin, H, W = x.shape
    # Eval-mode fold: cat([conv1, conv1]) -> conv2 weights collapse to 3 chans.
    w2_eff = (w2[0, :3] + w2[0, 3:]).reshape(-1)

    return pl.pallas_call(
        outblock_kernel,
        out_shape=jax.ShapeDtypeStruct((B, 1, H, W), jnp.float32),
        grid=(B,),
        in_specs=[
            pl.BlockSpec((1, Cin, H, W), lambda b: (b, 0, 0, 0)),
            pl.BlockSpec(memory_space=pltpu.MemorySpace.SMEM),  # w1 (flat)
            pl.BlockSpec(memory_space=pltpu.MemorySpace.SMEM),  # b1
            pl.BlockSpec(memory_space=pltpu.MemorySpace.SMEM),  # b2
            pl.BlockSpec(memory_space=pltpu.MemorySpace.SMEM),  # w2_eff (flat)
        ],
        out_specs=pl.BlockSpec((1, 1, H, W), lambda b: (b, 0, 0, 0)),
        scratch_shapes=[
            pltpu.VMEM((Cin, H + 2, W + 2), jnp.float32),  # padded input
            pltpu.VMEM((3, H + 2, W + 2), jnp.float32),    # padded conv1 out
        ],
        compiler_params=pltpu.CompilerParams(
            dimension_semantics=("parallel",)),
    )(x, w1.reshape(-1), b1, b2, w2_eff)


def outblock_reference(x, w1, b1, w2, b2):
    dn = ("NCHW", "OIHW", "NCHW")
    c1 = lax.conv_general_dilated(x, w1, (1, 1), "SAME",
                                  dimension_numbers=dn) + b1[None, :, None, None]
    cat = jnp.concatenate([c1, c1], axis=1)  # dropout is identity in eval
    out = lax.conv_general_dilated(cat, w2, (1, 1), "SAME",
                                   dimension_numbers=dn) + b2[None, :, None, None]
    return out


if __name__ == "__main__":
    B, Cin, H, W = 2, 4, 16, 16

    key = jax.random.PRNGKey(0)
    kx, kw1, kb1, kw2, kb2 = jax.random.split(key, 5)

    x = jax.random.normal(kx, (B, Cin, H, W), dtype=jnp.float32)
    # deterministic synthetic parameters (shapes from Outblock.__init__)
    w1 = 0.1 * jax.random.normal(kw1, (3, Cin, 3, 3), dtype=jnp.float32)
    b1 = 0.05 * jax.random.normal(kb1, (3,), dtype=jnp.float32)
    w2 = 0.1 * jax.random.normal(kw2, (1, 6, 3, 3), dtype=jnp.float32)
    b2 = 0.05 * jax.random.normal(kb2, (1,), dtype=jnp.float32)

    out = outblock_pallas(x, w1, b1, w2, b2)
    out = jax.block_until_ready(out)

    ref = jax.block_until_ready(outblock_reference(x, w1, b1, w2, b2))
    assert out.shape == (B, 1, H, W)
    assert jnp.allclose(out, ref, atol=1e-4, rtol=1e-4)

    print("KERNEL_OK")
</pallas_src>

<mosaic_0001>
module attributes {stable_mosaic.version = 11 : i64} {
  func.func @outblock_kernel(%arg0: i32, %arg1: memref<1x4x16x16xf32, #tpu.memory_space<vmem>>, %arg2: memref<108xf32, #tpu.memory_space<smem>>, %arg3: memref<3xf32, #tpu.memory_space<smem>>, %arg4: memref<1xf32, #tpu.memory_space<smem>>, %arg5: memref<27xf32, #tpu.memory_space<smem>>, %arg6: memref<1x1x16x16xf32, #tpu.memory_space<vmem>>, %arg7: memref<4x18x18xf32, #tpu.memory_space<vmem>>, %arg8: memref<3x18x18xf32, #tpu.memory_space<vmem>>) attributes {dimension_semantics = [#tpu.dimension_semantics<parallel>], iteration_bounds = array<i64: 2>, scalar_prefetch = 0 : i64, scratch_operands = 2 : i64, tpu.core_type = #tpu.core_type<tc>, window_params = [{transform_indices = @transform_0, window_bounds = array<i64: 1, 4, 16, 16>}, {transform_indices = @transform_1, window_bounds = array<i64: 108>}, {transform_indices = @transform_2, window_bounds = array<i64: 3>}, {transform_indices = @transform_3, window_bounds = array<i64: 1>}, {transform_indices = @transform_4, window_bounds = array<i64: 27>}, {transform_indices = @transform_5, window_bounds = array<i64: 1, 1, 16, 16>}]} {
    %cst = arith.constant 0.000000e+00 : f32
    %0 = vector.broadcast %cst : f32 to vector<4x1x18xf32>
    %c0 = arith.constant 0 : index
    %c0_0 = arith.constant 0 : index
    %c0_1 = arith.constant 0 : index
    %1 = vector.load %arg7[%c0, %c0_0, %c0_1] : memref<4x18x18xf32, #tpu.memory_space<vmem>>, vector<4x1x18xf32>
    tpu.vector_store %arg7[%c0, %c0_0, %c0_1], %0 {strides = array<i32>} : memref<4x18x18xf32, #tpu.memory_space<vmem>>, vector<4x1x18xf32>,
    %cst_2 = arith.constant 0.000000e+00 : f32
    %2 = vector.broadcast %cst_2 : f32 to vector<4x1x18xf32>
    %c0_3 = arith.constant 0 : index
    %c17 = arith.constant 17 : index
    %c0_4 = arith.constant 0 : index
    %3 = vector.load %arg7[%c0_3, %c17, %c0_4] : memref<4x18x18xf32, #tpu.memory_space<vmem>>, vector<4x1x18xf32>
    tpu.vector_store %arg7[%c0_3, %c17, %c0_4], %2 {strides = array<i32>} : memref<4x18x18xf32, #tpu.memory_space<vmem>>, vector<4x1x18xf32>,
    %cst_5 = arith.constant 0.000000e+00 : f32
    %4 = vector.broadcast %cst_5 : f32 to vector<4x18x1xf32>
    %c0_6 = arith.constant 0 : index
    %c0_7 = arith.constant 0 : index
    %c0_8 = arith.constant 0 : index
    %5 = vector.load %arg7[%c0_6, %c0_7, %c0_8] : memref<4x18x18xf32, #tpu.memory_space<vmem>>, vector<4x18x1xf32>
    tpu.vector_store %arg7[%c0_6, %c0_7, %c0_8], %4 {strides = array<i32>} : memref<4x18x18xf32, #tpu.memory_space<vmem>>, vector<4x18x1xf32>,
    %cst_9 = arith.constant 0.000000e+00 : f32
    %6 = vector.broadcast %cst_9 : f32 to vector<4x18x1xf32>
    %c0_10 = arith.constant 0 : index
    %c0_11 = arith.constant 0 : index
    %c17_12 = arith.constant 17 : index
    %7 = vector.load %arg7[%c0_10, %c0_11, %c17_12] : memref<4x18x18xf32, #tpu.memory_space<vmem>>, vector<4x18x1xf32>
    tpu.vector_store %arg7[%c0_10, %c0_11, %c17_12], %6 {strides = array<i32>} : memref<4x18x18xf32, #tpu.memory_space<vmem>>, vector<4x18x1xf32>,
    %cst_13 = arith.constant 0.000000e+00 : f32
    %8 = vector.broadcast %cst_13 : f32 to vector<3x1x18xf32>
    %c0_14 = arith.constant 0 : index
    %c0_15 = arith.constant 0 : index
    %c0_16 = arith.constant 0 : index
    %9 = vector.load %arg8[%c0_14, %c0_15, %c0_16] : memref<3x18x18xf32, #tpu.memory_space<vmem>>, vector<3x1x18xf32>
    tpu.vector_store %arg8[%c0_14, %c0_15, %c0_16], %8 {strides = array<i32>} : memref<3x18x18xf32, #tpu.memory_space<vmem>>, vector<3x1x18xf32>,
    %cst_17 = arith.constant 0.000000e+00 : f32
    %10 = vector.broadcast %cst_17 : f32 to vector<3x1x18xf32>
    %c0_18 = arith.constant 0 : index
    %c17_19 = arith.constant 17 : index
    %c0_20 = arith.constant 0 : index
    %11 = vector.load %arg8[%c0_18, %c17_19, %c0_20] : memref<3x18x18xf32, #tpu.memory_space<vmem>>, vector<3x1x18xf32>
    tpu.vector_store %arg8[%c0_18, %c17_19, %c0_20], %10 {strides = array<i32>} : memref<3x18x18xf32, #tpu.memory_space<vmem>>, vector<3x1x18xf32>,
    %cst_21 = arith.constant 0.000000e+00 : f32
    %12 = vector.broadcast %cst_21 : f32 to vector<3x18x1xf32>
    %c0_22 = arith.constant 0 : index
    %c0_23 = arith.constant 0 : index
    %c0_24 = arith.constant 0 : index
    %13 = vector.load %arg8[%c0_22, %c0_23, %c0_24] : memref<3x18x18xf32, #tpu.memory_space<vmem>>, vector<3x18x1xf32>
    tpu.vector_store %arg8[%c0_22, %c0_23, %c0_24], %12 {strides = array<i32>} : memref<3x18x18xf32, #tpu.memory_space<vmem>>, vector<3x18x1xf32>,
    %cst_25 = arith.constant 0.000000e+00 : f32
    %14 = vector.broadcast %cst_25 : f32 to vector<3x18x1xf32>
    %c0_26 = arith.constant 0 : index
    %c0_27 = arith.constant 0 : index
    %c17_28 = arith.constant 17 : index
    %15 = vector.load %arg8[%c0_26, %c0_27, %c17_28] : memref<3x18x18xf32, #tpu.memory_space<vmem>>, vector<3x18x1xf32>
    tpu.vector_store %arg8[%c0_26, %c0_27, %c17_28], %14 {strides = array<i32>} : memref<3x18x18xf32, #tpu.memory_space<vmem>>, vector<3x18x1xf32>,
    %c0_29 = arith.constant 0 : index
    %c0_30 = arith.constant 0 : index
    %c0_31 = arith.constant 0 : index
    %c0_32 = arith.constant 0 : index
    %16 = vector.load %arg1[%c0_29, %c0_30, %c0_31, %c0_32] : memref<1x4x16x16xf32, #tpu.memory_space<vmem>>, vector<1x4x16x16xf32>
    %17 = vector.shape_cast %16 : vector<1x4x16x16xf32> to vector<4x16x16xf32>
    %c0_33 = arith.constant 0 : index
    %c1 = arith.constant 1 : index
    %c1_34 = arith.constant 1 : index
    %18 = vector.load %arg7[%c0_33, %c1, %c1_34] : memref<4x18x18xf32, #tpu.memory_space<vmem>>, vector<4x16x16xf32>
    tpu.vector_store %arg7[%c0_33, %c1, %c1_34], %17 {strides = array<i32>} : memref<4x18x18xf32, #tpu.memory_space<vmem>>, vector<4x16x16xf32>,
    %c0_35 = arith.constant 0 : index
    %19 = memref.load %arg3[%c0_35] : memref<3xf32, #tpu.memory_space<smem>>
    %20 = vector.broadcast %19 : f32 to vector<16x16xf32>
    %c1_36 = arith.constant 1 : index
    %21 = memref.load %arg3[%c1_36] : memref<3xf32, #tpu.memory_space<smem>>
    %22 = vector.broadcast %21 : f32 to vector<16x16xf32>
    %c2 = arith.constant 2 : index
    %23 = memref.load %arg3[%c2] : memref<3xf32, #tpu.memory_space<smem>>
    %24 = vector.broadcast %23 : f32 to vector<16x16xf32>
    %c0_37 = arith.constant 0 : index
    %c0_38 = arith.constant 0 : index
    %c0_39 = arith.constant 0 : index
    %25 = vector.load %arg7[%c0_37, %c0_38, %c0_39] : memref<4x18x18xf32, #tpu.memory_space<vmem>>, vector<1x16x16xf32>
    %26 = vector.shape_cast %25 : vector<1x16x16xf32> to vector<16x16xf32>
    %c0_40 = arith.constant 0 : index
    %27 = memref.load %arg2[%c0_40] : memref<108xf32, #tpu.memory_space<smem>>
    %28 = vector.broadcast %27 : f32 to vector<16x16xf32>
    %29 = arith.mulf %26, %28 : vector<16x16xf32>
    %30 = arith.addf %20, %29 : vector<16x16xf32>
    %c36 = arith.constant 36 : index
    %31 = memref.load %arg2[%c36] : memref<108xf32, #tpu.memory_space<smem>>
    %32 = vector.broadcast %31 : f32 to vector<16x16xf32>
    %33 = arith.mulf %26, %32 : vector<16x16xf32>
    %34 = arith.addf %22, %33 : vector<16x16xf32>
    %c72 = arith.constant 72 : index
    %35 = memref.load %arg2[%c72] : memref<108xf32, #tpu.memory_space<smem>>
    %36 = vector.broadcast %35 : f32 to vector<16x16xf32>
    %37 = arith.mulf %26, %36 : vector<16x16xf32>
    %38 = arith.addf %24, %37 : vector<16x16xf32>
    %c0_41 = arith.constant 0 : index
    %c0_42 = arith.constant 0 : index
    %c1_43 = arith.constant 1 : index
    %39 = vector.load %arg7[%c0_41, %c0_42, %c1_43] : memref<4x18x18xf32, #tpu.memory_space<vmem>>, vector<1x16x16xf32>
    %40 = vector.shape_cast %39 : vector<1x16x16xf32> to vector<16x16xf32>
    %c1_44 = arith.constant 1 : index
    %41 = memref.load %arg2[%c1_44] : memref<108xf32, #tpu.memory_space<smem>>
    %42 = vector.broadcast %41 : f32 to vector<16x16xf32>
    %43 = arith.mulf %40, %42 : vector<16x16xf32>
    %44 = arith.addf %30, %43 : vector<16x16xf32>
    %c37 = arith.constant 37 : index
    %45 = memref.load %arg2[%c37] : memref<108xf32, #tpu.memory_space<smem>>
    %46 = vector.broadcast %45 : f32 to vector<16x16xf32>
    %47 = arith.mulf %40, %46 : vector<16x16xf32>
    %48 = arith.addf %34, %47 : vector<16x16xf32>
    %c73 = arith.constant 73 : index
    %49 = memref.load %arg2[%c73] : memref<108xf32, #tpu.memory_space<smem>>
    %50 = vector.broadcast %49 : f32 to vector<16x16xf32>
    %51 = arith.mulf %40, %50 : vector<16x16xf32>
    %52 = arith.addf %38, %51 : vector<16x16xf32>
    %c0_45 = arith.constant 0 : index
    %c0_46 = arith.constant 0 : index
    %c2_47 = arith.constant 2 : index
    %53 = vector.load %arg7[%c0_45, %c0_46, %c2_47] : memref<4x18x18xf32, #tpu.memory_space<vmem>>, vector<1x16x16xf32>
    %54 = vector.shape_cast %53 : vector<1x16x16xf32> to vector<16x16xf32>
    %c2_48 = arith.constant 2 : index
    %55 = memref.load %arg2[%c2_48] : memref<108xf32, #tpu.memory_space<smem>>
    %56 = vector.broadcast %55 : f32 to vector<16x16xf32>
    %57 = arith.mulf %54, %56 : vector<16x16xf32>
    %58 = arith.addf %44, %57 : vector<16x16xf32>
    %c38 = arith.constant 38 : index
    %59 = memref.load %arg2[%c38] : memref<108xf32, #tpu.memory_space<smem>>
    %60 = vector.broadcast %59 : f32 to vector<16x16xf32>
    %61 = arith.mulf %54, %60 : vector<16x16xf32>
    %62 = arith.addf %48, %61 : vector<16x16xf32>
    %c74 = arith.constant 74 : index
    %63 = memref.load %arg2[%c74] : memref<108xf32, #tpu.memory_space<smem>>
    %64 = vector.broadcast %63 : f32 to vector<16x16xf32>
    %65 = arith.mulf %54, %64 : vector<16x16xf32>
    %66 = arith.addf %52, %65 : vector<16x16xf32>
    %c0_49 = arith.constant 0 : index
    %c1_50 = arith.constant 1 : index
    %c0_51 = arith.constant 0 : index
    %67 = vector.load %arg7[%c0_49, %c1_50, %c0_51] : memref<4x18x18xf32, #tpu.memory_space<vmem>>, vector<1x16x16xf32>
    %68 = vector.shape_cast %67 : vector<1x16x16xf32> to vector<16x16xf32>
    %c3 = arith.constant 3 : index
    %69 = memref.load %arg2[%c3] : memref<108xf32, #tpu.memory_space<smem>>
    %70 = vector.broadcast %69 : f32 to vector<16x16xf32>
    %71 = arith.mulf %68, %70 : vector<16x16xf32>
    %72 = arith.addf %58, %71 : vector<16x16xf32>
    %c39 = arith.constant 39 : index
    %73 = memref.load %arg2[%c39] : memref<108xf32, #tpu.memory_space<smem>>
    %74 = vector.broadcast %73 : f32 to vector<16x16xf32>
    %75 = arith.mulf %68, %74 : vector<16x16xf32>
    %76 = arith.addf %62, %75 : vector<16x16xf32>
    %c75 = arith.constant 75 : index
    %77 = memref.load %arg2[%c75] : memref<108xf32, #tpu.memory_space<smem>>
    %78 = vector.broadcast %77 : f32 to vector<16x16xf32>
    %79 = arith.mulf %68, %78 : vector<16x16xf32>
    %80 = arith.addf %66, %79 : vector<16x16xf32>
    %c0_52 = arith.constant 0 : index
    %c1_53 = arith.constant 1 : index
    %c1_54 = arith.constant 1 : index
    %81 = vector.load %arg7[%c0_52, %c1_53, %c1_54] : memref<4x18x18xf32, #tpu.memory_space<vmem>>, vector<1x16x16xf32>
    %82 = vector.shape_cast %81 : vector<1x16x16xf32> to vector<16x16xf32>
    %c4 = arith.constant 4 : index
    %83 = memref.load %arg2[%c4] : memref<108xf32, #tpu.memory_space<smem>>
    %84 = vector.broadcast %83 : f32 to vector<16x16xf32>
    %85 = arith.mulf %82, %84 : vector<16x16xf32>
    %86 = arith.addf %72, %85 : vector<16x16xf32>
    %c40 = arith.constant 40 : index
    %87 = memref.load %arg2[%c40] : memref<108xf32, #tpu.memory_space<smem>>
    %88 = vector.broadcast %87 : f32 to vector<16x16xf32>
    %89 = arith.mulf %82, %88 : vector<16x16xf32>
    %90 = arith.addf %76, %89 : vector<16x16xf32>
    %c76 = arith.constant 76 : index
    %91 = memref.load %arg2[%c76] : memref<108xf32, #tpu.memory_space<smem>>
    %92 = vector.broadcast %91 : f32 to vector<16x16xf32>
    %93 = arith.mulf %82, %92 : vector<16x16xf32>
    %94 = arith.addf %80, %93 : vector<16x16xf32>
    %c0_55 = arith.constant 0 : index
    %c1_56 = arith.constant 1 : index
    %c2_57 = arith.constant 2 : index
    %95 = vector.load %arg7[%c0_55, %c1_56, %c2_57] : memref<4x18x18xf32, #tpu.memory_space<vmem>>, vector<1x16x16xf32>
    %96 = vector.shape_cast %95 : vector<1x16x16xf32> to vector<16x16xf32>
    %c5 = arith.constant 5 : index
    %97 = memref.load %arg2[%c5] : memref<108xf32, #tpu.memory_space<smem>>
    %98 = vector.broadcast %97 : f32 to vector<16x16xf32>
    %99 = arith.mulf %96, %98 : vector<16x16xf32>
    %100 = arith.addf %86, %99 : vector<16x16xf32>
    %c41 = arith.constant 41 : index
    %101 = memref.load %arg2[%c41] : memref<108xf32, #tpu.memory_space<smem>>
    %102 = vector.broadcast %101 : f32 to vector<16x16xf32>
    %103 = arith.mulf %96, %102 : vector<16x16xf32>
    %104 = arith.addf %90, %103 : vector<16x16xf32>
    %c77 = arith.constant 77 : index
    %105 = memref.load %arg2[%c77] : memref<108xf32, #tpu.memory_space<smem>>
    %106 = vector.broadcast %105 : f32 to vector<16x16xf32>
    %107 = arith.mulf %96, %106 : vector<16x16xf32>
    %108 = arith.addf %94, %107 : vector<16x16xf32>
    %c0_58 = arith.constant 0 : index
    %c2_59 = arith.constant 2 : index
    %c0_60 = arith.constant 0 : index
    %109 = vector.load %arg7[%c0_58, %c2_59, %c0_60] : memref<4x18x18xf32, #tpu.memory_space<vmem>>, vector<1x16x16xf32>
    %110 = vector.shape_cast %109 : vector<1x16x16xf32> to vector<16x16xf32>
    %c6 = arith.constant 6 : index
    %111 = memref.load %arg2[%c6] : memref<108xf32, #tpu.memory_space<smem>>
    %112 = vector.broadcast %111 : f32 to vector<16x16xf32>
    %113 = arith.mulf %110, %112 : vector<16x16xf32>
    %114 = arith.addf %100, %113 : vector<16x16xf32>
    %c42 = arith.constant 42 : index
    %115 = memref.load %arg2[%c42] : memref<108xf32, #tpu.memory_space<smem>>
    %116 = vector.broadcast %115 : f32 to vector<16x16xf32>
    %117 = arith.mulf %110, %116 : vector<16x16xf32>
    %118 = arith.addf %104, %117 : vector<16x16xf32>
    %c78 = arith.constant 78 : index
    %119 = memref.load %arg2[%c78] : memref<108xf32, #tpu.memory_space<smem>>
    %120 = vector.broadcast %119 : f32 to vector<16x16xf32>
    %121 = arith.mulf %110, %120 : vector<16x16xf32>
    %122 = arith.addf %108, %121 : vector<16x16xf32>
    %c0_61 = arith.constant 0 : index
    %c2_62 = arith.constant 2 : index
    %c1_63 = arith.constant 1 : index
    %123 = vector.load %arg7[%c0_61, %c2_62, %c1_63] : memref<4x18x18xf32, #tpu.memory_space<vmem>>, vector<1x16x16xf32>
    %124 = vector.shape_cast %123 : vector<1x16x16xf32> to vector<16x16xf32>
    %c7 = arith.constant 7 : index
    %125 = memref.load %arg2[%c7] : memref<108xf32, #tpu.memory_space<smem>>
    %126 = vector.broadcast %125 : f32 to vector<16x16xf32>
    %127 = arith.mulf %124, %126 : vector<16x16xf32>
    %128 = arith.addf %114, %127 : vector<16x16xf32>
    %c43 = arith.constant 43 : index
    %129 = memref.load %arg2[%c43] : memref<108xf32, #tpu.memory_space<smem>>
    %130 = vector.broadcast %129 : f32 to vector<16x16xf32>
    %131 = arith.mulf %124, %130 : vector<16x16xf32>
    %132 = arith.addf %118, %131 : vector<16x16xf32>
    %c79 = arith.constant 79 : index
    %133 = memref.load %arg2[%c79] : memref<108xf32, #tpu.memory_space<smem>>
    %134 = vector.broadcast %133 : f32 to vector<16x16xf32>
    %135 = arith.mulf %124, %134 : vector<16x16xf32>
    %136 = arith.addf %122, %135 : vector<16x16xf32>
    %c0_64 = arith.constant 0 : index
    %c2_65 = arith.constant 2 : index
    %c2_66 = arith.constant 2 : index
    %137 = vector.load %arg7[%c0_64, %c2_65, %c2_66] : memref<4x18x18xf32, #tpu.memory_space<vmem>>, vector<1x16x16xf32>
    %138 = vector.shape_cast %137 : vector<1x16x16xf32> to vector<16x16xf32>
    %c8 = arith.constant 8 : index
    %139 = memref.load %arg2[%c8] : memref<108xf32, #tpu.memory_space<smem>>
    %140 = vector.broadcast %139 : f32 to vector<16x16xf32>
    %141 = arith.mulf %138, %140 : vector<16x16xf32>
    %142 = arith.addf %128, %141 : vector<16x16xf32>
    %c44 = arith.constant 44 : index
    %143 = memref.load %arg2[%c44] : memref<108xf32, #tpu.memory_space<smem>>
    %144 = vector.broadcast %143 : f32 to vector<16x16xf32>
    %145 = arith.mulf %138, %144 : vector<16x16xf32>
    %146 = arith.addf %132, %145 : vector<16x16xf32>
    %c80 = arith.constant 80 : index
    %147 = memref.load %arg2[%c80] : memref<108xf32, #tpu.memory_space<smem>>
    %148 = vector.broadcast %147 : f32 to vector<16x16xf32>
    %149 = arith.mulf %138, %148 : vector<16x16xf32>
    %150 = arith.addf %136, %149 : vector<16x16xf32>
    %c1_67 = arith.constant 1 : index
    %c0_68 = arith.constant 0 : index
    %c0_69 = arith.constant 0 : index
    %151 = vector.load %arg7[%c1_67, %c0_68, %c0_69] : memref<4x18x18xf32, #tpu.memory_space<vmem>>, vector<1x16x16xf32>
    %152 = vector.shape_cast %151 : vector<1x16x16xf32> to vector<16x16xf32>
    %c9 = arith.constant 9 : index
    %153 = memref.load %arg2[%c9] : memref<108xf32, #tpu.memory_space<smem>>
    %154 = vector.broadcast %153 : f32 to vector<16x16xf32>
    %155 = arith.mulf %152, %154 : vector<16x16xf32>
    %156 = arith.addf %142, %155 : vector<16x16xf32>
    %c45 = arith.constant 45 : index
    %157 = memref.load %arg2[%c45] : memref<108xf32, #tpu.memory_space<smem>>
    %158 = vector.broadcast %157 : f32 to vector<16x16xf32>
    %159 = arith.mulf %152, %158 : vector<16x16xf32>
    %160 = arith.addf %146, %159 : vector<16x16xf32>
    %c81 = arith.constant 81 : index
    %161 = memref.load %arg2[%c81] : memref<108xf32, #tpu.memory_space<smem>>
    %162 = vector.broadcast %161 : f32 to vector<16x16xf32>
    %163 = arith.mulf %152, %162 : vector<16x16xf32>
    %164 = arith.addf %150, %163 : vector<16x16xf32>
    %c1_70 = arith.constant 1 : index
    %c0_71 = arith.constant 0 : index
    %c1_72 = arith.constant 1 : index
    %165 = vector.load %arg7[%c1_70, %c0_71, %c1_72] : memref<4x18x18xf32, #tpu.memory_space<vmem>>, vector<1x16x16xf32>
    %166 = vector.shape_cast %165 : vector<1x16x16xf32> to vector<16x16xf32>
    %c10 = arith.constant 10 : index
    %167 = memref.load %arg2[%c10] : memref<108xf32, #tpu.memory_space<smem>>
    %168 = vector.broadcast %167 : f32 to vector<16x16xf32>
    %169 = arith.mulf %166, %168 : vector<16x16xf32>
    %170 = arith.addf %156, %169 : vector<16x16xf32>
    %c46 = arith.constant 46 : index
    %171 = memref.load %arg2[%c46] : memref<108xf32, #tpu.memory_space<smem>>
    %172 = vector.broadcast %171 : f32 to vector<16x16xf32>
    %173 = arith.mulf %166, %172 : vector<16x16xf32>
    %174 = arith.addf %160, %173 : vector<16x16xf32>
    %c82 = arith.constant 82 : index
    %175 = memref.load %arg2[%c82] : memref<108xf32, #tpu.memory_space<smem>>
    %176 = vector.broadcast %175 : f32 to vector<16x16xf32>
    %177 = arith.mulf %166, %176 : vector<16x16xf32>
    %178 = arith.addf %164, %177 : vector<16x16xf32>
    %c1_73 = arith.constant 1 : index
    %c0_74 = arith.constant 0 : index
    %c2_75 = arith.constant 2 : index
    %179 = vector.load %arg7[%c1_73, %c0_74, %c2_75] : memref<4x18x18xf32, #tpu.memory_space<vmem>>, vector<1x16x16xf32>
    %180 = vector.shape_cast %179 : vector<1x16x16xf32> to vector<16x16xf32>
    %c11 = arith.constant 11 : index
    %181 = memref.load %arg2[%c11] : memref<108xf32, #tpu.memory_space<smem>>
    %182 = vector.broadcast %181 : f32 to vector<16x16xf32>
    %183 = arith.mulf %180, %182 : vector<16x16xf32>
    %184 = arith.addf %170, %183 : vector<16x16xf32>
    %c47 = arith.constant 47 : index
    %185 = memref.load %arg2[%c47] : memref<108xf32, #tpu.memory_space<smem>>
    %186 = vector.broadcast %185 : f32 to vector<16x16xf32>
    %187 = arith.mulf %180, %186 : vector<16x16xf32>
    %188 = arith.addf %174, %187 : vector<16x16xf32>
    %c83 = arith.constant 83 : index
    %189 = memref.load %arg2[%c83] : memref<108xf32, #tpu.memory_space<smem>>
    %190 = vector.broadcast %189 : f32 to vector<16x16xf32>
    %191 = arith.mulf %180, %190 : vector<16x16xf32>
    %192 = arith.addf %178, %191 : vector<16x16xf32>
    %c1_76 = arith.constant 1 : index
    %c1_77 = arith.constant 1 : index
    %c0_78 = arith.constant 0 : index
    %193 = vector.load %arg7[%c1_76, %c1_77, %c0_78] : memref<4x18x18xf32, #tpu.memory_space<vmem>>, vector<1x16x16xf32>
    %194 = vector.shape_cast %193 : vector<1x16x16xf32> to vector<16x16xf32>
    %c12 = arith.constant 12 : index
    %195 = memref.load %arg2[%c12] : memref<108xf32, #tpu.memory_space<smem>>
    %196 = vector.broadcast %195 : f32 to vector<16x16xf32>
    %197 = arith.mulf %194, %196 : vector<16x16xf32>
    %198 = arith.addf %184, %197 : vector<16x16xf32>
    %c48 = arith.constant 48 : index
    %199 = memref.load %arg2[%c48] : memref<108xf32, #tpu.memory_space<smem>>
    %200 = vector.broadcast %199 : f32 to vector<16x16xf32>
    %201 = arith.mulf %194, %200 : vector<16x16xf32>
    %202 = arith.addf %188, %201 : vector<16x16xf32>
    %c84 = arith.constant 84 : index
    %203 = memref.load %arg2[%c84] : memref<108xf32, #tpu.memory_space<smem>>
    %204 = vector.broadcast %203 : f32 to vector<16x16xf32>
    %205 = arith.mulf %194, %204 : vector<16x16xf32>
    %206 = arith.addf %192, %205 : vector<16x16xf32>
    %c1_79 = arith.constant 1 : index
    %c1_80 = arith.constant 1 : index
    %c1_81 = arith.constant 1 : index
    %207 = vector.load %arg7[%c1_79, %c1_80, %c1_81] : memref<4x18x18xf32, #tpu.memory_space<vmem>>, vector<1x16x16xf32>
    %208 = vector.shape_cast %207 : vector<1x16x16xf32> to vector<16x16xf32>
    %c13 = arith.constant 13 : index
    %209 = memref.load %arg2[%c13] : memref<108xf32, #tpu.memory_space<smem>>
    %210 = vector.broadcast %209 : f32 to vector<16x16xf32>
    %211 = arith.mulf %208, %210 : vector<16x16xf32>
    %212 = arith.addf %198, %211 : vector<16x16xf32>
    %c49 = arith.constant 49 : index
    %213 = memref.load %arg2[%c49] : memref<108xf32, #tpu.memory_space<smem>>
    %214 = vector.broadcast %213 : f32 to vector<16x16xf32>
    %215 = arith.mulf %208, %214 : vector<16x16xf32>
    %216 = arith.addf %202, %215 : vector<16x16xf32>
    %c85 = arith.constant 85 : index
    %217 = memref.load %arg2[%c85] : memref<108xf32, #tpu.memory_space<smem>>
    %218 = vector.broadcast %217 : f32 to vector<16x16xf32>
    %219 = arith.mulf %208, %218 : vector<16x16xf32>
    %220 = arith.addf %206, %219 : vector<16x16xf32>
    %c1_82 = arith.constant 1 : index
    %c1_83 = arith.constant 1 : index
    %c2_84 = arith.constant 2 : index
    %221 = vector.load %arg7[%c1_82, %c1_83, %c2_84] : memref<4x18x18xf32, #tpu.memory_space<vmem>>, vector<1x16x16xf32>
    %222 = vector.shape_cast %221 : vector<1x16x16xf32> to vector<16x16xf32>
    %c14 = arith.constant 14 : index
    %223 = memref.load %arg2[%c14] : memref<108xf32, #tpu.memory_space<smem>>
    %224 = vector.broadcast %223 : f32 to vector<16x16xf32>
    %225 = arith.mulf %222, %224 : vector<16x16xf32>
    %226 = arith.addf %212, %225 : vector<16x16xf32>
    %c50 = arith.constant 50 : index
    %227 = memref.load %arg2[%c50] : memref<108xf32, #tpu.memory_space<smem>>
    %228 = vector.broadcast %227 : f32 to vector<16x16xf32>
    %229 = arith.mulf %222, %228 : vector<16x16xf32>
    %230 = arith.addf %216, %229 : vector<16x16xf32>
    %c86 = arith.constant 86 : index
    %231 = memref.load %arg2[%c86] : memref<108xf32, #tpu.memory_space<smem>>
    %232 = vector.broadcast %231 : f32 to vector<16x16xf32>
    %233 = arith.mulf %222, %232 : vector<16x16xf32>
    %234 = arith.addf %220, %233 : vector<16x16xf32>
    %c1_85 = arith.constant 1 : index
    %c2_86 = arith.constant 2 : index
    %c0_87 = arith.constant 0 : index
    %235 = vector.load %arg7[%c1_85, %c2_86, %c0_87] : memref<4x18x18xf32, #tpu.memory_space<vmem>>, vector<1x16x16xf32>
    %236 = vector.shape_cast %235 : vector<1x16x16xf32> to vector<16x16xf32>
    %c15 = arith.constant 15 : index
    %237 = memref.load %arg2[%c15] : memref<108xf32, #tpu.memory_space<smem>>
    %238 = vector.broadcast %237 : f32 to vector<16x16xf32>
    %239 = arith.mulf %236, %238 : vector<16x16xf32>
    %240 = arith.addf %226, %239 : vector<16x16xf32>
    %c51 = arith.constant 51 : index
    %241 = memref.load %arg2[%c51] : memref<108xf32, #tpu.memory_space<smem>>
    %242 = vector.broadcast %241 : f32 to vector<16x16xf32>
    %243 = arith.mulf %236, %242 : vector<16x16xf32>
    %244 = arith.addf %230, %243 : vector<16x16xf32>
    %c87 = arith.constant 87 : index
    %245 = memref.load %arg2[%c87] : memref<108xf32, #tpu.memory_space<smem>>
    %246 = vector.broadcast %245 : f32 to vector<16x16xf32>
    %247 = arith.mulf %236, %246 : vector<16x16xf32>
    %248 = arith.addf %234, %247 : vector<16x16xf32>
    %c1_88 = arith.constant 1 : index
    %c2_89 = arith.constant 2 : index
    %c1_90 = arith.constant 1 : index
    %249 = vector.load %arg7[%c1_88, %c2_89, %c1_90] : memref<4x18x18xf32, #tpu.memory_space<vmem>>, vector<1x16x16xf32>
    %250 = vector.shape_cast %249 : vector<1x16x16xf32> to vector<16x16xf32>
    %c16 = arith.constant 16 : index
    %251 = memref.load %arg2[%c16] : memref<108xf32, #tpu.memory_space<smem>>
    %252 = vector.broadcast %251 : f32 to vector<16x16xf32>
    %253 = arith.mulf %250, %252 : vector<16x16xf32>
    %254 = arith.addf %240, %253 : vector<16x16xf32>
    %c52 = arith.constant 52 : index
    %255 = memref.load %arg2[%c52] : memref<108xf32, #tpu.memory_space<smem>>
    %256 = vector.broadcast %255 : f32 to vector<16x16xf32>
    %257 = arith.mulf %250, %256 : vector<16x16xf32>
    %258 = arith.addf %244, %257 : vector<16x16xf32>
    %c88 = arith.constant 88 : index
    %259 = memref.load %arg2[%c88] : memref<108xf32, #tpu.memory_space<smem>>
    %260 = vector.broadcast %259 : f32 to vector<16x16xf32>
    %261 = arith.mulf %250, %260 : vector<16x16xf32>
    %262 = arith.addf %248, %261 : vector<16x16xf32>
    %c1_91 = arith.constant 1 : index
    %c2_92 = arith.constant 2 : index
    %c2_93 = arith.constant 2 : index
    %263 = vector.load %arg7[%c1_91, %c2_92, %c2_93] : memref<4x18x18xf32, #tpu.memory_space<vmem>>, vector<1x16x16xf32>
    %264 = vector.shape_cast %263 : vector<1x16x16xf32> to vector<16x16xf32>
    %c17_94 = arith.constant 17 : index
    %265 = memref.load %arg2[%c17_94] : memref<108xf32, #tpu.memory_space<smem>>
    %266 = vector.broadcast %265 : f32 to vector<16x16xf32>
    %267 = arith.mulf %264, %266 : vector<16x16xf32>
    %268 = arith.addf %254, %267 : vector<16x16xf32>
    %c53 = arith.constant 53 : index
    %269 = memref.load %arg2[%c53] : memref<108xf32, #tpu.memory_space<smem>>
    %270 = vector.broadcast %269 : f32 to vector<16x16xf32>
    %271 = arith.mulf %264, %270 : vector<16x16xf32>
    %272 = arith.addf %258, %271 : vector<16x16xf32>
    %c89 = arith.constant 89 : index
    %273 = memref.load %arg2[%c89] : memref<108xf32, #tpu.memory_space<smem>>
    %274 = vector.broadcast %273 : f32 to vector<16x16xf32>
    %275 = arith.mulf %264, %274 : vector<16x16xf32>
    %276 = arith.addf %262, %275 : vector<16x16xf32>
    %c2_95 = arith.constant 2 : index
    %c0_96 = arith.constant 0 : index
    %c0_97 = arith.constant 0 : index
    %277 = vector.load %arg7[%c2_95, %c0_96, %c0_97] : memref<4x18x18xf32, #tpu.memory_space<vmem>>, vector<1x16x16xf32>
    %278 = vector.shape_cast %277 : vector<1x16x16xf32> to vector<16x16xf32>
    %c18 = arith.constant 18 : index
    %279 = memref.load %arg2[%c18] : memref<108xf32, #tpu.memory_space<smem>>
    %280 = vector.broadcast %279 : f32 to vector<16x16xf32>
    %281 = arith.mulf %278, %280 : vector<16x16xf32>
    %282 = arith.addf %268, %281 : vector<16x16xf32>
    %c54 = arith.constant 54 : index
    %283 = memref.load %arg2[%c54] : memref<108xf32, #tpu.memory_space<smem>>
    %284 = vector.broadcast %283 : f32 to vector<16x16xf32>
    %285 = arith.mulf %278, %284 : vector<16x16xf32>
    %286 = arith.addf %272, %285 : vector<16x16xf32>
    %c90 = arith.constant 90 : index
    %287 = memref.load %arg2[%c90] : memref<108xf32, #tpu.memory_space<smem>>
    %288 = vector.broadcast %287 : f32 to vector<16x16xf32>
    %289 = arith.mulf %278, %288 : vector<16x16xf32>
    %290 = arith.addf %276, %289 : vector<16x16xf32>
    %c2_98 = arith.constant 2 : index
    %c0_99 = arith.constant 0 : index
    %c1_100 = arith.constant 1 : index
    %291 = vector.load %arg7[%c2_98, %c0_99, %c1_100] : memref<4x18x18xf32, #tpu.memory_space<vmem>>, vector<1x16x16xf32>
    %292 = vector.shape_cast %291 : vector<1x16x16xf32> to vector<16x16xf32>
    %c19 = arith.constant 19 : index
    %293 = memref.load %arg2[%c19] : memref<108xf32, #tpu.memory_space<smem>>
    %294 = vector.broadcast %293 : f32 to vector<16x16xf32>
    %295 = arith.mulf %292, %294 : vector<16x16xf32>
    %296 = arith.addf %282, %295 : vector<16x16xf32>
    %c55 = arith.constant 55 : index
    %297 = memref.load %arg2[%c55] : memref<108xf32, #tpu.memory_space<smem>>
    %298 = vector.broadcast %297 : f32 to vector<16x16xf32>
    %299 = arith.mulf %292, %298 : vector<16x16xf32>
    %300 = arith.addf %286, %299 : vector<16x16xf32>
    %c91 = arith.constant 91 : index
    %301 = memref.load %arg2[%c91] : memref<108xf32, #tpu.memory_space<smem>>
    %302 = vector.broadcast %301 : f32 to vector<16x16xf32>
    %303 = arith.mulf %292, %302 : vector<16x16xf32>
    %304 = arith.addf %290, %303 : vector<16x16xf32>
    %c2_101 = arith.constant 2 : index
    %c0_102 = arith.constant 0 : index
    %c2_103 = arith.constant 2 : index
    %305 = vector.load %arg7[%c2_101, %c0_102, %c2_103] : memref<4x18x18xf32, #tpu.memory_space<vmem>>, vector<1x16x16xf32>
    %306 = vector.shape_cast %305 : vector<1x16x16xf32> to vector<16x16xf32>
    %c20 = arith.constant 20 : index
    %307 = memref.load %arg2[%c20] : memref<108xf32, #tpu.memory_space<smem>>
    %308 = vector.broadcast %307 : f32 to vector<16x16xf32>
    %309 = arith.mulf %306, %308 : vector<16x16xf32>
    %310 = arith.addf %296, %309 : vector<16x16xf32>
    %c56 = arith.constant 56 : index
    %311 = memref.load %arg2[%c56] : memref<108xf32, #tpu.memory_space<smem>>
    %312 = vector.broadcast %311 : f32 to vector<16x16xf32>
    %313 = arith.mulf %306, %312 : vector<16x16xf32>
    %314 = arith.addf %300, %313 : vector<16x16xf32>
    %c92 = arith.constant 92 : index
    %315 = memref.load %arg2[%c92] : memref<108xf32, #tpu.memory_space<smem>>
    %316 = vector.broadcast %315 : f32 to vector<16x16xf32>
    %317 = arith.mulf %306, %316 : vector<16x16xf32>
    %318 = arith.addf %304, %317 : vector<16x16xf32>
    %c2_104 = arith.constant 2 : index
    %c1_105 = arith.constant 1 : index
    %c0_106 = arith.constant 0 : index
    %319 = vector.load %arg7[%c2_104, %c1_105, %c0_106] : memref<4x18x18xf32, #tpu.memory_space<vmem>>, vector<1x16x16xf32>
    %320 = vector.shape_cast %319 : vector<1x16x16xf32> to vector<16x16xf32>
    %c21 = arith.constant 21 : index
    %321 = memref.load %arg2[%c21] : memref<108xf32, #tpu.memory_space<smem>>
    %322 = vector.broadcast %321 : f32 to vector<16x16xf32>
    %323 = arith.mulf %320, %322 : vector<16x16xf32>
    %324 = arith.addf %310, %323 : vector<16x16xf32>
    %c57 = arith.constant 57 : index
    %325 = memref.load %arg2[%c57] : memref<108xf32, #tpu.memory_space<smem>>
    %326 = vector.broadcast %325 : f32 to vector<16x16xf32>
    %327 = arith.mulf %320, %326 : vector<16x16xf32>
    %328 = arith.addf %314, %327 : vector<16x16xf32>
    %c93 = arith.constant 93 : index
    %329 = memref.load %arg2[%c93] : memref<108xf32, #tpu.memory_space<smem>>
    %330 = vector.broadcast %329 : f32 to vector<16x16xf32>
    %331 = arith.mulf %320, %330 : vector<16x16xf32>
    %332 = arith.addf %318, %331 : vector<16x16xf32>
    %c2_107 = arith.constant 2 : index
    %c1_108 = arith.constant 1 : index
    %c1_109 = arith.constant 1 : index
    %333 = vector.load %arg7[%c2_107, %c1_108, %c1_109] : memref<4x18x18xf32, #tpu.memory_space<vmem>>, vector<1x16x16xf32>
    %334 = vector.shape_cast %333 : vector<1x16x16xf32> to vector<16x16xf32>
    %c22 = arith.constant 22 : index
    %335 = memref.load %arg2[%c22] : memref<108xf32, #tpu.memory_space<smem>>
    %336 = vector.broadcast %335 : f32 to vector<16x16xf32>
    %337 = arith.mulf %334, %336 : vector<16x16xf32>
    %338 = arith.addf %324, %337 : vector<16x16xf32>
    %c58 = arith.constant 58 : index
    %339 = memref.load %arg2[%c58] : memref<108xf32, #tpu.memory_space<smem>>
    %340 = vector.broadcast %339 : f32 to vector<16x16xf32>
    %341 = arith.mulf %334, %340 : vector<16x16xf32>
    %342 = arith.addf %328, %341 : vector<16x16xf32>
    %c94 = arith.constant 94 : index
    %343 = memref.load %arg2[%c94] : memref<108xf32, #tpu.memory_space<smem>>
    %344 = vector.broadcast %343 : f32 to vector<16x16xf32>
    %345 = arith.mulf %334, %344 : vector<16x16xf32>
    %346 = arith.addf %332, %345 : vector<16x16xf32>
    %c2_110 = arith.constant 2 : index
    %c1_111 = arith.constant 1 : index
    %c2_112 = arith.constant 2 : index
    %347 = vector.load %arg7[%c2_110, %c1_111, %c2_112] : memref<4x18x18xf32, #tpu.memory_space<vmem>>, vector<1x16x16xf32>
    %348 = vector.shape_cast %347 : vector<1x16x16xf32> to vector<16x16xf32>
    %c23 = arith.constant 23 : index
    %349 = memref.load %arg2[%c23] : memref<108xf32, #tpu.memory_space<smem>>
    %350 = vector.broadcast %349 : f32 to vector<16x16xf32>
    %351 = arith.mulf %348, %350 : vector<16x16xf32>
    %352 = arith.addf %338, %351 : vector<16x16xf32>
    %c59 = arith.constant 59 : index
    %353 = memref.load %arg2[%c59] : memref<108xf32, #tpu.memory_space<smem>>
    %354 = vector.broadcast %353 : f32 to vector<16x16xf32>
    %355 = arith.mulf %348, %354 : vector<16x16xf32>
    %356 = arith.addf %342, %355 : vector<16x16xf32>
    %c95 = arith.constant 95 : index
    %357 = memref.load %arg2[%c95] : memref<108xf32, #tpu.memory_space<smem>>
    %358 = vector.broadcast %357 : f32 to vector<16x16xf32>
    %359 = arith.mulf %348, %358 : vector<16x16xf32>
    %360 = arith.addf %346, %359 : vector<16x16xf32>
    %c2_113 = arith.constant 2 : index
    %c2_114 = arith.constant 2 : index
    %c0_115 = arith.constant 0 : index
    %361 = vector.load %arg7[%c2_113, %c2_114, %c0_115] : memref<4x18x18xf32, #tpu.memory_space<vmem>>, vector<1x16x16xf32>
    %362 = vector.shape_cast %361 : vector<1x16x16xf32> to vector<16x16xf32>
    %c24 = arith.constant 24 : index
    %363 = memref.load %arg2[%c24] : memref<108xf32, #tpu.memory_space<smem>>
    %364 = vector.broadcast %363 : f32 to vector<16x16xf32>
    %365 = arith.mulf %362, %364 : vector<16x16xf32>
    %366 = arith.addf %352, %365 : vector<16x16xf32>
    %c60 = arith.constant 60 : index
    %367 = memref.load %arg2[%c60] : memref<108xf32, #tpu.memory_space<smem>>
    %368 = vector.broadcast %367 : f32 to vector<16x16xf32>
    %369 = arith.mulf %362, %368 : vector<16x16xf32>
    %370 = arith.addf %356, %369 : vector<16x16xf32>
    %c96 = arith.constant 96 : index
    %371 = memref.load %arg2[%c96] : memref<108xf32, #tpu.memory_space<smem>>
    %372 = vector.broadcast %371 : f32 to vector<16x16xf32>
    %373 = arith.mulf %362, %372 : vector<16x16xf32>
    %374 = arith.addf %360, %373 : vector<16x16xf32>
    %c2_116 = arith.constant 2 : index
    %c2_117 = arith.constant 2 : index
    %c1_118 = arith.constant 1 : index
    %375 = vector.load %arg7[%c2_116, %c2_117, %c1_118] : memref<4x18x18xf32, #tpu.memory_space<vmem>>, vector<1x16x16xf32>
    %376 = vector.shape_cast %375 : vector<1x16x16xf32> to vector<16x16xf32>
    %c25 = arith.constant 25 : index
    %377 = memref.load %arg2[%c25] : memref<108xf32, #tpu.memory_space<smem>>
    %378 = vector.broadcast %377 : f32 to vector<16x16xf32>
    %379 = arith.mulf %376, %378 : vector<16x16xf32>
    %380 = arith.addf %366, %379 : vector<16x16xf32>
    %c61 = arith.constant 61 : index
    %381 = memref.load %arg2[%c61] : memref<108xf32, #tpu.memory_space<smem>>
    %382 = vector.broadcast %381 : f32 to vector<16x16xf32>
    %383 = arith.mulf %376, %382 : vector<16x16xf32>
    %384 = arith.addf %370, %383 : vector<16x16xf32>
    %c97 = arith.constant 97 : index
    %385 = memref.load %arg2[%c97] : memref<108xf32, #tpu.memory_space<smem>>
    %386 = vector.broadcast %385 : f32 to vector<16x16xf32>
    %387 = arith.mulf %376, %386 : vector<16x16xf32>
    %388 = arith.addf %374, %387 : vector<16x16xf32>
    %c2_119 = arith.constant 2 : index
    %c2_120 = arith.constant 2 : index
    %c2_121 = arith.constant 2 : index
    %389 = vector.load %arg7[%c2_119, %c2_120, %c2_121] : memref<4x18x18xf32, #tpu.memory_space<vmem>>, vector<1x16x16xf32>
    %390 = vector.shape_cast %389 : vector<1x16x16xf32> to vector<16x16xf32>
    %c26 = arith.constant 26 : index
    %391 = memref.load %arg2[%c26] : memref<108xf32, #tpu.memory_space<smem>>
    %392 = vector.broadcast %391 : f32 to vector<16x16xf32>
    %393 = arith.mulf %390, %392 : vector<16x16xf32>
    %394 = arith.addf %380, %393 : vector<16x16xf32>
    %c62 = arith.constant 62 : index
    %395 = memref.load %arg2[%c62] : memref<108xf32, #tpu.memory_space<smem>>
    %396 = vector.broadcast %395 : f32 to vector<16x16xf32>
    %397 = arith.mulf %390, %396 : vector<16x16xf32>
    %398 = arith.addf %384, %397 : vector<16x16xf32>
    %c98 = arith.constant 98 : index
    %399 = memref.load %arg2[%c98] : memref<108xf32, #tpu.memory_space<smem>>
    %400 = vector.broadcast %399 : f32 to vector<16x16xf32>
    %401 = arith.mulf %390, %400 : vector<16x16xf32>
    %402 = arith.addf %388, %401 : vector<16x16xf32>
    %c3_122 = arith.constant 3 : index
    %c0_123 = arith.constant 0 : index
    %c0_124 = arith.constant 0 : index
    %403 = vector.load %arg7[%c3_122, %c0_123, %c0_124] : memref<4x18x18xf32, #tpu.memory_space<vmem>>, vector<1x16x16xf32>
    %404 = vector.shape_cast %403 : vector<1x16x16xf32> to vector<16x16xf32>
    %c27 = arith.constant 27 : index
    %405 = memref.load %arg2[%c27] : memref<108xf32, #tpu.memory_space<smem>>
    %406 = vector.broadcast %405 : f32 to vector<16x16xf32>
    %407 = arith.mulf %404, %406 : vector<16x16xf32>
    %408 = arith.addf %394, %407 : vector<16x16xf32>
    %c63 = arith.constant 63 : index
    %409 = memref.load %arg2[%c63] : memref<108xf32, #tpu.memory_space<smem>>
    %410 = vector.broadcast %409 : f32 to vector<16x16xf32>
    %411 = arith.mulf %404, %410 : vector<16x16xf32>
    %412 = arith.addf %398, %411 : vector<16x16xf32>
    %c99 = arith.constant 99 : index
    %413 = memref.load %arg2[%c99] : memref<108xf32, #tpu.memory_space<smem>>
    %414 = vector.broadcast %413 : f32 to vector<16x16xf32>
    %415 = arith.mulf %404, %414 : vector<16x16xf32>
    %416 = arith.addf %402, %415 : vector<16x16xf32>
    %c3_125 = arith.constant 3 : index
    %c0_126 = arith.constant 0 : index
    %c1_127 = arith.constant 1 : index
    %417 = vector.load %arg7[%c3_125, %c0_126, %c1_127] : memref<4x18x18xf32, #tpu.memory_space<vmem>>, vector<1x16x16xf32>
    %418 = vector.shape_cast %417 : vector<1x16x16xf32> to vector<16x16xf32>
    %c28 = arith.constant 28 : index
    %419 = memref.load %arg2[%c28] : memref<108xf32, #tpu.memory_space<smem>>
    %420 = vector.broadcast %419 : f32 to vector<16x16xf32>
    %421 = arith.mulf %418, %420 : vector<16x16xf32>
    %422 = arith.addf %408, %421 : vector<16x16xf32>
    %c64 = arith.constant 64 : index
    %423 = memref.load %arg2[%c64] : memref<108xf32, #tpu.memory_space<smem>>
    %424 = vector.broadcast %423 : f32 to vector<16x16xf32>
    %425 = arith.mulf %418, %424 : vector<16x16xf32>
    %426 = arith.addf %412, %425 : vector<16x16xf32>
    %c100 = arith.constant 100 : index
    %427 = memref.load %arg2[%c100] : memref<108xf32, #tpu.memory_space<smem>>
    %428 = vector.broadcast %427 : f32 to vector<16x16xf32>
    %429 = arith.mulf %418, %428 : vector<16x16xf32>
    %430 = arith.addf %416, %429 : vector<16x16xf32>
    %c3_128 = arith.constant 3 : index
    %c0_129 = arith.constant 0 : index
    %c2_130 = arith.constant 2 : index
    %431 = vector.load %arg7[%c3_128, %c0_129, %c2_130] : memref<4x18x18xf32, #tpu.memory_space<vmem>>, vector<1x16x16xf32>
    %432 = vector.shape_cast %431 : vector<1x16x16xf32> to vector<16x16xf32>
    %c29 = arith.constant 29 : index
    %433 = memref.load %arg2[%c29] : memref<108xf32, #tpu.memory_space<smem>>
    %434 = vector.broadcast %433 : f32 to vector<16x16xf32>
    %435 = arith.mulf %432, %434 : vector<16x16xf32>
    %436 = arith.addf %422, %435 : vector<16x16xf32>
    %c65 = arith.constant 65 : index
    %437 = memref.load %arg2[%c65] : memref<108xf32, #tpu.memory_space<smem>>
    %438 = vector.broadcast %437 : f32 to vector<16x16xf32>
    %439 = arith.mulf %432, %438 : vector<16x16xf32>
    %440 = arith.addf %426, %439 : vector<16x16xf32>
    %c101 = arith.constant 101 : index
    %441 = memref.load %arg2[%c101] : memref<108xf32, #tpu.memory_space<smem>>
    %442 = vector.broadcast %441 : f32 to vector<16x16xf32>
    %443 = arith.mulf %432, %442 : vector<16x16xf32>
    %444 = arith.addf %430, %443 : vector<16x16xf32>
    %c3_131 = arith.constant 3 : index
    %c1_132 = arith.constant 1 : index
    %c0_133 = arith.constant 0 : index
    %445 = vector.load %arg7[%c3_131, %c1_132, %c0_133] : memref<4x18x18xf32, #tpu.memory_space<vmem>>, vector<1x16x16xf32>
    %446 = vector.shape_cast %445 : vector<1x16x16xf32> to vector<16x16xf32>
    %c30 = arith.constant 30 : index
    %447 = memref.load %arg2[%c30] : memref<108xf32, #tpu.memory_space<smem>>
    %448 = vector.broadcast %447 : f32 to vector<16x16xf32>
    %449 = arith.mulf %446, %448 : vector<16x16xf32>
    %450 = arith.addf %436, %449 : vector<16x16xf32>
    %c66 = arith.constant 66 : index
    %451 = memref.load %arg2[%c66] : memref<108xf32, #tpu.memory_space<smem>>
    %452 = vector.broadcast %451 : f32 to vector<16x16xf32>
    %453 = arith.mulf %446, %452 : vector<16x16xf32>
    %454 = arith.addf %440, %453 : vector<16x16xf32>
    %c102 = arith.constant 102 : index
    %455 = memref.load %arg2[%c102] : memref<108xf32, #tpu.memory_space<smem>>
    %456 = vector.broadcast %455 : f32 to vector<16x16xf32>
    %457 = arith.mulf %446, %456 : vector<16x16xf32>
    %458 = arith.addf %444, %457 : vector<16x16xf32>
    %c3_134 = arith.constant 3 : index
    %c1_135 = arith.constant 1 : index
    %c1_136 = arith.constant 1 : index
    %459 = vector.load %arg7[%c3_134, %c1_135, %c1_136] : memref<4x18x18xf32, #tpu.memory_space<vmem>>, vector<1x16x16xf32>
    %460 = vector.shape_cast %459 : vector<1x16x16xf32> to vector<16x16xf32>
    %c31 = arith.constant 31 : index
    %461 = memref.load %arg2[%c31] : memref<108xf32, #tpu.memory_space<smem>>
    %462 = vector.broadcast %461 : f32 to vector<16x16xf32>
    %463 = arith.mulf %460, %462 : vector<16x16xf32>
    %464 = arith.addf %450, %463 : vector<16x16xf32>
    %c67 = arith.constant 67 : index
    %465 = memref.load %arg2[%c67] : memref<108xf32, #tpu.memory_space<smem>>
    %466 = vector.broadcast %465 : f32 to vector<16x16xf32>
    %467 = arith.mulf %460, %466 : vector<16x16xf32>
    %468 = arith.addf %454, %467 : vector<16x16xf32>
    %c103 = arith.constant 103 : index
    %469 = memref.load %arg2[%c103] : memref<108xf32, #tpu.memory_space<smem>>
    %470 = vector.broadcast %469 : f32 to vector<16x16xf32>
    %471 = arith.mulf %460, %470 : vector<16x16xf32>
    %472 = arith.addf %458, %471 : vector<16x16xf32>
    %c3_137 = arith.constant 3 : index
    %c1_138 = arith.constant 1 : index
    %c2_139 = arith.constant 2 : index
    %473 = vector.load %arg7[%c3_137, %c1_138, %c2_139] : memref<4x18x18xf32, #tpu.memory_space<vmem>>, vector<1x16x16xf32>
    %474 = vector.shape_cast %473 : vector<1x16x16xf32> to vector<16x16xf32>
    %c32 = arith.constant 32 : index
    %475 = memref.load %arg2[%c32] : memref<108xf32, #tpu.memory_space<smem>>
    %476 = vector.broadcast %475 : f32 to vector<16x16xf32>
    %477 = arith.mulf %474, %476 : vector<16x16xf32>
    %478 = arith.addf %464, %477 : vector<16x16xf32>
    %c68 = arith.constant 68 : index
    %479 = memref.load %arg2[%c68] : memref<108xf32, #tpu.memory_space<smem>>
    %480 = vector.broadcast %479 : f32 to vector<16x16xf32>
    %481 = arith.mulf %474, %480 : vector<16x16xf32>
    %482 = arith.addf %468, %481 : vector<16x16xf32>
    %c104 = arith.constant 104 : index
    %483 = memref.load %arg2[%c104] : memref<108xf32, #tpu.memory_space<smem>>
    %484 = vector.broadcast %483 : f32 to vector<16x16xf32>
    %485 = arith.mulf %474, %484 : vector<16x16xf32>
    %486 = arith.addf %472, %485 : vector<16x16xf32>
    %c3_140 = arith.constant 3 : index
    %c2_141 = arith.constant 2 : index
    %c0_142 = arith.constant 0 : index
    %487 = vector.load %arg7[%c3_140, %c2_141, %c0_142] : memref<4x18x18xf32, #tpu.memory_space<vmem>>, vector<1x16x16xf32>
    %488 = vector.shape_cast %487 : vector<1x16x16xf32> to vector<16x16xf32>
    %c33 = arith.constant 33 : index
    %489 = memref.load %arg2[%c33] : memref<108xf32, #tpu.memory_space<smem>>
    %490 = vector.broadcast %489 : f32 to vector<16x16xf32>
    %491 = arith.mulf %488, %490 : vector<16x16xf32>
    %492 = arith.addf %478, %491 : vector<16x16xf32>
    %c69 = arith.constant 69 : index
    %493 = memref.load %arg2[%c69] : memref<108xf32, #tpu.memory_space<smem>>
    %494 = vector.broadcast %493 : f32 to vector<16x16xf32>
    %495 = arith.mulf %488, %494 : vector<16x16xf32>
    %496 = arith.addf %482, %495 : vector<16x16xf32>
    %c105 = arith.constant 105 : index
    %497 = memref.load %arg2[%c105] : memref<108xf32, #tpu.memory_space<smem>>
    %498 = vector.broadcast %497 : f32 to vector<16x16xf32>
    %499 = arith.mulf %488, %498 : vector<16x16xf32>
    %500 = arith.addf %486, %499 : vector<16x16xf32>
    %c3_143 = arith.constant 3 : index
    %c2_144 = arith.constant 2 : index
    %c1_145 = arith.constant 1 : index
    %501 = vector.load %arg7[%c3_143, %c2_144, %c1_145] : memref<4x18x18xf32, #tpu.memory_space<vmem>>, vector<1x16x16xf32>
    %502 = vector.shape_cast %501 : vector<1x16x16xf32> to vector<16x16xf32>
    %c34 = arith.constant 34 : index
    %503 = memref.load %arg2[%c34] : memref<108xf32, #tpu.memory_space<smem>>
    %504 = vector.broadcast %503 : f32 to vector<16x16xf32>
    %505 = arith.mulf %502, %504 : vector<16x16xf32>
    %506 = arith.addf %492, %505 : vector<16x16xf32>
    %c70 = arith.constant 70 : index
    %507 = memref.load %arg2[%c70] : memref<108xf32, #tpu.memory_space<smem>>
    %508 = vector.broadcast %507 : f32 to vector<16x16xf32>
    %509 = arith.mulf %502, %508 : vector<16x16xf32>
    %510 = arith.addf %496, %509 : vector<16x16xf32>
    %c106 = arith.constant 106 : index
    %511 = memref.load %arg2[%c106] : memref<108xf32, #tpu.memory_space<smem>>
    %512 = vector.broadcast %511 : f32 to vector<16x16xf32>
    %513 = arith.mulf %502, %512 : vector<16x16xf32>
    %514 = arith.addf %500, %513 : vector<16x16xf32>
    %c3_146 = arith.constant 3 : index
    %c2_147 = arith.constant 2 : index
    %c2_148 = arith.constant 2 : index
    %515 = vector.load %arg7[%c3_146, %c2_147, %c2_148] : memref<4x18x18xf32, #tpu.memory_space<vmem>>, vector<1x16x16xf32>
    %516 = vector.shape_cast %515 : vector<1x16x16xf32> to vector<16x16xf32>
    %c35 = arith.constant 35 : index
    %517 = memref.load %arg2[%c35] : memref<108xf32, #tpu.memory_space<smem>>
    %518 = vector.broadcast %517 : f32 to vector<16x16xf32>
    %519 = arith.mulf %516, %518 : vector<16x16xf32>
    %520 = arith.addf %506, %519 : vector<16x16xf32>
    %c71 = arith.constant 71 : index
    %521 = memref.load %arg2[%c71] : memref<108xf32, #tpu.memory_space<smem>>
    %522 = vector.broadcast %521 : f32 to vector<16x16xf32>
    %523 = arith.mulf %516, %522 : vector<16x16xf32>
    %524 = arith.addf %510, %523 : vector<16x16xf32>
    %c107 = arith.constant 107 : index
    %525 = memref.load %arg2[%c107] : memref<108xf32, #tpu.memory_space<smem>>
    %526 = vector.broadcast %525 : f32 to vector<16x16xf32>
    %527 = arith.mulf %516, %526 : vector<16x16xf32>
    %528 = arith.addf %514, %527 : vector<16x16xf32>
    %c0_149 = arith.constant 0 : index
    %c1_150 = arith.constant 1 : index
    %c1_151 = arith.constant 1 : index
    %529 = vector.load %arg8[%c0_149, %c1_150, %c1_151] : memref<3x18x18xf32, #tpu.memory_space<vmem>>, vector<1x16x16xf32>
    %530 = vector.shape_cast %529 : vector<1x16x16xf32> to vector<16x16xf32>
    %531 = vector.shape_cast %520 : vector<16x16xf32> to vector<1x16x16xf32>
    tpu.vector_store %arg8[%c0_149, %c1_150, %c1_151], %531 {strides = array<i32>} : memref<3x18x18xf32, #tpu.memory_space<vmem>>, vector<1x16x16xf32>,
    %c1_152 = arith.constant 1 : index
    %c1_153 = arith.constant 1 : index
    %c1_154 = arith.constant 1 : index
    %532 = vector.load %arg8[%c1_152, %c1_153, %c1_154] : memref<3x18x18xf32, #tpu.memory_space<vmem>>, vector<1x16x16xf32>
    %533 = vector.shape_cast %532 : vector<1x16x16xf32> to vector<16x16xf32>
    %534 = vector.shape_cast %524 : vector<16x16xf32> to vector<1x16x16xf32>
    tpu.vector_store %arg8[%c1_152, %c1_153, %c1_154], %534 {strides = array<i32>} : memref<3x18x18xf32, #tpu.memory_space<vmem>>, vector<1x16x16xf32>,
    %c2_155 = arith.constant 2 : index
    %c1_156 = arith.constant 1 : index
    %c1_157 = arith.constant 1 : index
    %535 = vector.load %arg8[%c2_155, %c1_156, %c1_157] : memref<3x18x18xf32, #tpu.memory_space<vmem>>, vector<1x16x16xf32>
    %536 = vector.shape_cast %535 : vector<1x16x16xf32> to vector<16x16xf32>
    %537 = vector.shape_cast %528 : vector<16x16xf32> to vector<1x16x16xf32>
    tpu.vector_store %arg8[%c2_155, %c1_156, %c1_157], %537 {strides = array<i32>} : memref<3x18x18xf32, #tpu.memory_space<vmem>>, vector<1x16x16xf32>,
    %c0_158 = arith.constant 0 : index
    %538 = memref.load %arg4[%c0_158] : memref<1xf32, #tpu.memory_space<smem>>
    %539 = vector.broadcast %538 : f32 to vector<16x16xf32>
    %c0_159 = arith.constant 0 : index
    %540 = memref.load %arg5[%c0_159] : memref<27xf32, #tpu.memory_space<smem>>
    %c0_160 = arith.constant 0 : index
    %c0_161 = arith.constant 0 : index
    %c0_162 = arith.constant 0 : index
    %541 = vector.load %arg8[%c0_160, %c0_161, %c0_162] : memref<3x18x18xf32, #tpu.memory_space<vmem>>, vector<1x16x16xf32>
    %542 = vector.shape_cast %541 : vector<1x16x16xf32> to vector<16x16xf32>
    %543 = vector.broadcast %540 : f32 to vector<16x16xf32>
    %544 = arith.mulf %542, %543 : vector<16x16xf32>
    %545 = arith.addf %539, %544 : vector<16x16xf32>
    %c1_163 = arith.constant 1 : index
    %546 = memref.load %arg5[%c1_163] : memref<27xf32, #tpu.memory_space<smem>>
    %c0_164 = arith.constant 0 : index
    %c0_165 = arith.constant 0 : index
    %c1_166 = arith.constant 1 : index
    %547 = vector.load %arg8[%c0_164, %c0_165, %c1_166] : memref<3x18x18xf32, #tpu.memory_space<vmem>>, vector<1x16x16xf32>
    %548 = vector.shape_cast %547 : vector<1x16x16xf32> to vector<16x16xf32>
    %549 = vector.broadcast %546 : f32 to vector<16x16xf32>
    %550 = arith.mulf %548, %549 : vector<16x16xf32>
    %551 = arith.addf %545, %550 : vector<16x16xf32>
    %c2_167 = arith.constant 2 : index
    %552 = memref.load %arg5[%c2_167] : memref<27xf32, #tpu.memory_space<smem>>
    %c0_168 = arith.constant 0 : index
    %c0_169 = arith.constant 0 : index
    %c2_170 = arith.constant 2 : index
    %553 = vector.load %arg8[%c0_168, %c0_169, %c2_170] : memref<3x18x18xf32, #tpu.memory_space<vmem>>, vector<1x16x16xf32>
    %554 = vector.shape_cast %553 : vector<1x16x16xf32> to vector<16x16xf32>
    %555 = vector.broadcast %552 : f32 to vector<16x16xf32>
    %556 = arith.mulf %554, %555 : vector<16x16xf32>
    %557 = arith.addf %551, %556 : vector<16x16xf32>
    %c3_171 = arith.constant 3 : index
    %558 = memref.load %arg5[%c3_171] : memref<27xf32, #tpu.memory_space<smem>>
    %c0_172 = arith.constant 0 : index
    %c1_173 = arith.constant 1 : index
    %c0_174 = arith.constant 0 : index
    %559 = vector.load %arg8[%c0_172, %c1_173, %c0_174] : memref<3x18x18xf32, #tpu.memory_space<vmem>>, vector<1x16x16xf32>
    %560 = vector.shape_cast %559 : vector<1x16x16xf32> to vector<16x16xf32>
    %561 = vector.broadcast %558 : f32 to vector<16x16xf32>
    %562 = arith.mulf %560, %561 : vector<16x16xf32>
    %563 = arith.addf %557, %562 : vector<16x16xf32>
    %c4_175 = arith.constant 4 : index
    %564 = memref.load %arg5[%c4_175] : memref<27xf32, #tpu.memory_space<smem>>
    %c0_176 = arith.constant 0 : index
    %c1_177 = arith.constant 1 : index
    %c1_178 = arith.constant 1 : index
    %565 = vector.load %arg8[%c0_176, %c1_177, %c1_178] : memref<3x18x18xf32, #tpu.memory_space<vmem>>, vector<1x16x16xf32>
    %566 = vector.shape_cast %565 : vector<1x16x16xf32> to vector<16x16xf32>
    %567 = vector.broadcast %564 : f32 to vector<16x16xf32>
    %568 = arith.mulf %566, %567 : vector<16x16xf32>
    %569 = arith.addf %563, %568 : vector<16x16xf32>
    %c5_179 = arith.constant 5 : index
    %570 = memref.load %arg5[%c5_179] : memref<27xf32, #tpu.memory_space<smem>>
    %c0_180 = arith.constant 0 : index
    %c1_181 = arith.constant 1 : index
    %c2_182 = arith.constant 2 : index
    %571 = vector.load %arg8[%c0_180, %c1_181, %c2_182] : memref<3x18x18xf32, #tpu.memory_space<vmem>>, vector<1x16x16xf32>
    %572 = vector.shape_cast %571 : vector<1x16x16xf32> to vector<16x16xf32>
    %573 = vector.broadcast %570 : f32 to vector<16x16xf32>
    %574 = arith.mulf %572, %573 : vector<16x16xf32>
    %575 = arith.addf %569, %574 : vector<16x16xf32>
    %c6_183 = arith.constant 6 : index
    %576 = memref.load %arg5[%c6_183] : memref<27xf32, #tpu.memory_space<smem>>
    %c0_184 = arith.constant 0 : index
    %c2_185 = arith.constant 2 : index
    %c0_186 = arith.constant 0 : index
    %577 = vector.load %arg8[%c0_184, %c2_185, %c0_186] : memref<3x18x18xf32, #tpu.memory_space<vmem>>, vector<1x16x16xf32>
    %578 = vector.shape_cast %577 : vector<1x16x16xf32> to vector<16x16xf32>
    %579 = vector.broadcast %576 : f32 to vector<16x16xf32>
    %580 = arith.mulf %578, %579 : vector<16x16xf32>
    %581 = arith.addf %575, %580 : vector<16x16xf32>
    %c7_187 = arith.constant 7 : index
    %582 = memref.load %arg5[%c7_187] : memref<27xf32, #tpu.memory_space<smem>>
    %c0_188 = arith.constant 0 : index
    %c2_189 = arith.constant 2 : index
    %c1_190 = arith.constant 1 : index
    %583 = vector.load %arg8[%c0_188, %c2_189, %c1_190] : memref<3x18x18xf32, #tpu.memory_space<vmem>>, vector<1x16x16xf32>
    %584 = vector.shape_cast %583 : vector<1x16x16xf32> to vector<16x16xf32>
    %585 = vector.broadcast %582 : f32 to vector<16x16xf32>
    %586 = arith.mulf %584, %585 : vector<16x16xf32>
    %587 = arith.addf %581, %586 : vector<16x16xf32>
    %c8_191 = arith.constant 8 : index
    %588 = memref.load %arg5[%c8_191] : memref<27xf32, #tpu.memory_space<smem>>
    %c0_192 = arith.constant 0 : index
    %c2_193 = arith.constant 2 : index
    %c2_194 = arith.constant 2 : index
    %589 = vector.load %arg8[%c0_192, %c2_193, %c2_194] : memref<3x18x18xf32, #tpu.memory_space<vmem>>, vector<1x16x16xf32>
    %590 = vector.shape_cast %589 : vector<1x16x16xf32> to vector<16x16xf32>
    %591 = vector.broadcast %588 : f32 to vector<16x16xf32>
    %592 = arith.mulf %590, %591 : vector<16x16xf32>
    %593 = arith.addf %587, %592 : vector<16x16xf32>
    %c9_195 = arith.constant 9 : index
    %594 = memref.load %arg5[%c9_195] : memref<27xf32, #tpu.memory_space<smem>>
    %c1_196 = arith.constant 1 : index
    %c0_197 = arith.constant 0 : index
    %c0_198 = arith.constant 0 : index
    %595 = vector.load %arg8[%c1_196, %c0_197, %c0_198] : memref<3x18x18xf32, #tpu.memory_space<vmem>>, vector<1x16x16xf32>
    %596 = vector.shape_cast %595 : vector<1x16x16xf32> to vector<16x16xf32>
    %597 = vector.broadcast %594 : f32 to vector<16x16xf32>
    %598 = arith.mulf %596, %597 : vector<16x16xf32>
    %599 = arith.addf %593, %598 : vector<16x16xf32>
    %c10_199 = arith.constant 10 : index
    %600 = memref.load %arg5[%c10_199] : memref<27xf32, #tpu.memory_space<smem>>
    %c1_200 = arith.constant 1 : index
    %c0_201 = arith.constant 0 : index
    %c1_202 = arith.constant 1 : index
    %601 = vector.load %arg8[%c1_200, %c0_201, %c1_202] : memref<3x18x18xf32, #tpu.memory_space<vmem>>, vector<1x16x16xf32>
    %602 = vector.shape_cast %601 : vector<1x16x16xf32> to vector<16x16xf32>
    %603 = vector.broadcast %600 : f32 to vector<16x16xf32>
    %604 = arith.mulf %602, %603 : vector<16x16xf32>
    %605 = arith.addf %599, %604 : vector<16x16xf32>
    %c11_203 = arith.constant 11 : index
    %606 = memref.load %arg5[%c11_203] : memref<27xf32, #tpu.memory_space<smem>>
    %c1_204 = arith.constant 1 : index
    %c0_205 = arith.constant 0 : index
    %c2_206 = arith.constant 2 : index
    %607 = vector.load %arg8[%c1_204, %c0_205, %c2_206] : memref<3x18x18xf32, #tpu.memory_space<vmem>>, vector<1x16x16xf32>
    %608 = vector.shape_cast %607 : vector<1x16x16xf32> to vector<16x16xf32>
    %609 = vector.broadcast %606 : f32 to vector<16x16xf32>
    %610 = arith.mulf %608, %609 : vector<16x16xf32>
    %611 = arith.addf %605, %610 : vector<16x16xf32>
    %c12_207 = arith.constant 12 : index
    %612 = memref.load %arg5[%c12_207] : memref<27xf32, #tpu.memory_space<smem>>
    %c1_208 = arith.constant 1 : index
    %c1_209 = arith.constant 1 : index
    %c0_210 = arith.constant 0 : index
    %613 = vector.load %arg8[%c1_208, %c1_209, %c0_210] : memref<3x18x18xf32, #tpu.memory_space<vmem>>, vector<1x16x16xf32>
    %614 = vector.shape_cast %613 : vector<1x16x16xf32> to vector<16x16xf32>
    %615 = vector.broadcast %612 : f32 to vector<16x16xf32>
    %616 = arith.mulf %614, %615 : vector<16x16xf32>
    %617 = arith.addf %611, %616 : vector<16x16xf32>
    %c13_211 = arith.constant 13 : index
    %618 = memref.load %arg5[%c13_211] : memref<27xf32, #tpu.memory_space<smem>>
    %c1_212 = arith.constant 1 : index
    %c1_213 = arith.constant 1 : index
    %c1_214 = arith.constant 1 : index
    %619 = vector.load %arg8[%c1_212, %c1_213, %c1_214] : memref<3x18x18xf32, #tpu.memory_space<vmem>>, vector<1x16x16xf32>
    %620 = vector.shape_cast %619 : vector<1x16x16xf32> to vector<16x16xf32>
    %621 = vector.broadcast %618 : f32 to vector<16x16xf32>
    %622 = arith.mulf %620, %621 : vector<16x16xf32>
    %623 = arith.addf %617, %622 : vector<16x16xf32>
    %c14_215 = arith.constant 14 : index
    %624 = memref.load %arg5[%c14_215] : memref<27xf32, #tpu.memory_space<smem>>
    %c1_216 = arith.constant 1 : index
    %c1_217 = arith.constant 1 : index
    %c2_218 = arith.constant 2 : index
    %625 = vector.load %arg8[%c1_216, %c1_217, %c2_218] : memref<3x18x18xf32, #tpu.memory_space<vmem>>, vector<1x16x16xf32>
    %626 = vector.shape_cast %625 : vector<1x16x16xf32> to vector<16x16xf32>
    %627 = vector.broadcast %624 : f32 to vector<16x16xf32>
    %628 = arith.mulf %626, %627 : vector<16x16xf32>
    %629 = arith.addf %623, %628 : vector<16x16xf32>
    %c15_219 = arith.constant 15 : index
    %630 = memref.load %arg5[%c15_219] : memref<27xf32, #tpu.memory_space<smem>>
    %c1_220 = arith.constant 1 : index
    %c2_221 = arith.constant 2 : index
    %c0_222 = arith.constant 0 : index
    %631 = vector.load %arg8[%c1_220, %c2_221, %c0_222] : memref<3x18x18xf32, #tpu.memory_space<vmem>>, vector<1x16x16xf32>
    %632 = vector.shape_cast %631 : vector<1x16x16xf32> to vector<16x16xf32>
    %633 = vector.broadcast %630 : f32 to vector<16x16xf32>
    %634 = arith.mulf %632, %633 : vector<16x16xf32>
    %635 = arith.addf %629, %634 : vector<16x16xf32>
    %c16_223 = arith.constant 16 : index
    %636 = memref.load %arg5[%c16_223] : memref<27xf32, #tpu.memory_space<smem>>
    %c1_224 = arith.constant 1 : index
    %c2_225 = arith.constant 2 : index
    %c1_226 = arith.constant 1 : index
    %637 = vector.load %arg8[%c1_224, %c2_225, %c1_226] : memref<3x18x18xf32, #tpu.memory_space<vmem>>, vector<1x16x16xf32>
    %638 = vector.shape_cast %637 : vector<1x16x16xf32> to vector<16x16xf32>
    %639 = vector.broadcast %636 : f32 to vector<16x16xf32>
    %640 = arith.mulf %638, %639 : vector<16x16xf32>
    %641 = arith.addf %635, %640 : vector<16x16xf32>
    %c17_227 = arith.constant 17 : index
    %642 = memref.load %arg5[%c17_227] : memref<27xf32, #tpu.memory_space<smem>>
    %c1_228 = arith.constant 1 : index
    %c2_229 = arith.constant 2 : index
    %c2_230 = arith.constant 2 : index
    %643 = vector.load %arg8[%c1_228, %c2_229, %c2_230] : memref<3x18x18xf32, #tpu.memory_space<vmem>>, vector<1x16x16xf32>
    %644 = vector.shape_cast %643 : vector<1x16x16xf32> to vector<16x16xf32>
    %645 = vector.broadcast %642 : f32 to vector<16x16xf32>
    %646 = arith.mulf %644, %645 : vector<16x16xf32>
    %647 = arith.addf %641, %646 : vector<16x16xf32>
    %c18_231 = arith.constant 18 : index
    %648 = memref.load %arg5[%c18_231] : memref<27xf32, #tpu.memory_space<smem>>
    %c2_232 = arith.constant 2 : index
    %c0_233 = arith.constant 0 : index
    %c0_234 = arith.constant 0 : index
    %649 = vector.load %arg8[%c2_232, %c0_233, %c0_234] : memref<3x18x18xf32, #tpu.memory_space<vmem>>, vector<1x16x16xf32>
    %650 = vector.shape_cast %649 : vector<1x16x16xf32> to vector<16x16xf32>
    %651 = vector.broadcast %648 : f32 to vector<16x16xf32>
    %652 = arith.mulf %650, %651 : vector<16x16xf32>
    %653 = arith.addf %647, %652 : vector<16x16xf32>
    %c19_235 = arith.constant 19 : index
    %654 = memref.load %arg5[%c19_235] : memref<27xf32, #tpu.memory_space<smem>>
    %c2_236 = arith.constant 2 : index
    %c0_237 = arith.constant 0 : index
    %c1_238 = arith.constant 1 : index
    %655 = vector.load %arg8[%c2_236, %c0_237, %c1_238] : memref<3x18x18xf32, #tpu.memory_space<vmem>>, vector<1x16x16xf32>
    %656 = vector.shape_cast %655 : vector<1x16x16xf32> to vector<16x16xf32>
    %657 = vector.broadcast %654 : f32 to vector<16x16xf32>
    %658 = arith.mulf %656, %657 : vector<16x16xf32>
    %659 = arith.addf %653, %658 : vector<16x16xf32>
    %c20_239 = arith.constant 20 : index
    %660 = memref.load %arg5[%c20_239] : memref<27xf32, #tpu.memory_space<smem>>
    %c2_240 = arith.constant 2 : index
    %c0_241 = arith.constant 0 : index
    %c2_242 = arith.constant 2 : index
    %661 = vector.load %arg8[%c2_240, %c0_241, %c2_242] : memref<3x18x18xf32, #tpu.memory_space<vmem>>, vector<1x16x16xf32>
    %662 = vector.shape_cast %661 : vector<1x16x16xf32> to vector<16x16xf32>
    %663 = vector.broadcast %660 : f32 to vector<16x16xf32>
    %664 = arith.mulf %662, %663 : vector<16x16xf32>
    %665 = arith.addf %659, %664 : vector<16x16xf32>
    %c21_243 = arith.constant 21 : index
    %666 = memref.load %arg5[%c21_243] : memref<27xf32, #tpu.memory_space<smem>>
    %c2_244 = arith.constant 2 : index
    %c1_245 = arith.constant 1 : index
    %c0_246 = arith.constant 0 : index
    %667 = vector.load %arg8[%c2_244, %c1_245, %c0_246] : memref<3x18x18xf32, #tpu.memory_space<vmem>>, vector<1x16x16xf32>
    %668 = vector.shape_cast %667 : vector<1x16x16xf32> to vector<16x16xf32>
    %669 = vector.broadcast %666 : f32 to vector<16x16xf32>
    %670 = arith.mulf %668, %669 : vector<16x16xf32>
    %671 = arith.addf %665, %670 : vector<16x16xf32>
    %c22_247 = arith.constant 22 : index
    %672 = memref.load %arg5[%c22_247] : memref<27xf32, #tpu.memory_space<smem>>
    %c2_248 = arith.constant 2 : index
    %c1_249 = arith.constant 1 : index
    %c1_250 = arith.constant 1 : index
    %673 = vector.load %arg8[%c2_248, %c1_249, %c1_250] : memref<3x18x18xf32, #tpu.memory_space<vmem>>, vector<1x16x16xf32>
    %674 = vector.shape_cast %673 : vector<1x16x16xf32> to vector<16x16xf32>
    %675 = vector.broadcast %672 : f32 to vector<16x16xf32>
    %676 = arith.mulf %674, %675 : vector<16x16xf32>
    %677 = arith.addf %671, %676 : vector<16x16xf32>
    %c23_251 = arith.constant 23 : index
    %678 = memref.load %arg5[%c23_251] : memref<27xf32, #tpu.memory_space<smem>>
    %c2_252 = arith.constant 2 : index
    %c1_253 = arith.constant 1 : index
    %c2_254 = arith.constant 2 : index
    %679 = vector.load %arg8[%c2_252, %c1_253, %c2_254] : memref<3x18x18xf32, #tpu.memory_space<vmem>>, vector<1x16x16xf32>
    %680 = vector.shape_cast %679 : vector<1x16x16xf32> to vector<16x16xf32>
    %681 = vector.broadcast %678 : f32 to vector<16x16xf32>
    %682 = arith.mulf %680, %681 : vector<16x16xf32>
    %683 = arith.addf %677, %682 : vector<16x16xf32>
    %c24_255 = arith.constant 24 : index
    %684 = memref.load %arg5[%c24_255] : memref<27xf32, #tpu.memory_space<smem>>
    %c2_256 = arith.constant 2 : index
    %c2_257 = arith.constant 2 : index
    %c0_258 = arith.constant 0 : index
    %685 = vector.load %arg8[%c2_256, %c2_257, %c0_258] : memref<3x18x18xf32, #tpu.memory_space<vmem>>, vector<1x16x16xf32>
    %686 = vector.shape_cast %685 : vector<1x16x16xf32> to vector<16x16xf32>
    %687 = vector.broadcast %684 : f32 to vector<16x16xf32>
    %688 = arith.mulf %686, %687 : vector<16x16xf32>
    %689 = arith.addf %683, %688 : vector<16x16xf32>
    %c25_259 = arith.constant 25 : index
    %690 = memref.load %arg5[%c25_259] : memref<27xf32, #tpu.memory_space<smem>>
    %c2_260 = arith.constant 2 : index
    %c2_261 = arith.constant 2 : index
    %c1_262 = arith.constant 1 : index
    %691 = vector.load %arg8[%c2_260, %c2_261, %c1_262] : memref<3x18x18xf32, #tpu.memory_space<vmem>>, vector<1x16x16xf32>
    %692 = vector.shape_cast %691 : vector<1x16x16xf32> to vector<16x16xf32>
    %693 = vector.broadcast %690 : f32 to vector<16x16xf32>
    %694 = arith.mulf %692, %693 : vector<16x16xf32>
    %695 = arith.addf %689, %694 : vector<16x16xf32>
    %c26_263 = arith.constant 26 : index
    %696 = memref.load %arg5[%c26_263] : memref<27xf32, #tpu.memory_space<smem>>
    %c2_264 = arith.constant 2 : index
    %c2_265 = arith.constant 2 : index
    %c2_266 = arith.constant 2 : index
    %697 = vector.load %arg8[%c2_264, %c2_265, %c2_266] : memref<3x18x18xf32, #tpu.memory_space<vmem>>, vector<1x16x16xf32>
    %698 = vector.shape_cast %697 : vector<1x16x16xf32> to vector<16x16xf32>
    %699 = vector.broadcast %696 : f32 to vector<16x16xf32>
    %700 = arith.mulf %698, %699 : vector<16x16xf32>
    %701 = arith.addf %695, %700 : vector<16x16xf32>
    %c0_267 = arith.constant 0 : index
    %c0_268 = arith.constant 0 : index
    %c0_269 = arith.constant 0 : index
    %c0_270 = arith.constant 0 : index
    %702 = vector.load %arg6[%c0_267, %c0_268, %c0_269, %c0_270] : memref<1x1x16x16xf32, #tpu.memory_space<vmem>>, vector<1x1x16x16xf32>
    %703 = vector.shape_cast %702 : vector<1x1x16x16xf32> to vector<16x16xf32>
    %704 = vector.shape_cast %701 : vector<16x16xf32> to vector<1x1x16x16xf32>
    tpu.vector_store %arg6[%c0_267, %c0_268, %c0_269, %c0_270], %704 {strides = array<i32>} : memref<1x1x16x16xf32, #tpu.memory_space<vmem>>, vector<1x1x16x16xf32>,
    return
  }
  func.func @transform_0(%arg0: i32) -> (i32, i32, i32, i32) {
    %c0_i32 = arith.constant 0 : i32
    %c0_i32_0 = arith.constant 0 : i32
    %c0_i32_1 = arith.constant 0 : i32
    %c0_i32_2 = arith.constant 0 : i32
    return %arg0, %c0_i32, %c0_i32_0, %c0_i32_1 : i32, i32, i32, i32
  }
  func.func @transform_1(%arg0: i32) -> i32 {
    %c0_i32 = arith.constant 0 : i32
    %c0_i32_0 = arith.constant 0 : i32
    return %c0_i32 : i32
  }
  func.func @transform_2(%arg0: i32) -> i32 {
    %c0_i32 = arith.constant 0 : i32
    %c0_i32_0 = arith.constant 0 : i32
    return %c0_i32 : i32
  }
  func.func @transform_3(%arg0: i32) -> i32 {
    %c0_i32 = arith.constant 0 : i32
    %c0_i32_0 = arith.constant 0 : i32
    return %c0_i32 : i32
  }
  func.func @transform_4(%arg0: i32) -> i32 {
    %c0_i32 = arith.constant 0 : i32
    %c0_i32_0 = arith.constant 0 : i32
    return %c0_i32 : i32
  }
  func.func @transform_5(%arg0: i32) -> (i32, i32, i32, i32) {
    %c0_i32 = arith.constant 0 : i32
    %c0_i32_0 = arith.constant 0 : i32
    %c0_i32_1 = arith.constant 0 : i32
    %c0_i32_2 = arith.constant 0 : i32
    return %arg0, %c0_i32, %c0_i32_0, %c0_i32_1 : i32, i32, i32, i32
  }
}

</mosaic_0001>

<llo_original>
// kernel: tpu_custom_call.1
$region0: #{tpu_custom_call.1}
  #allocation0 [shape = 'u32[]', space=smem, size = 0x4, offset = 0x4, fixed_abs, tag = 'smem constant byte address 0x4 - core index']
  #allocation1 [shape = 'u32[144,128]{1,0:T(1,128)}', space=vmem, size = 0x12000, scoped, tag = 'internal scratch']
  #allocation2 [shape = 'f32[4,18,18]{2,1,0:T(8,128)}', space=vmem, size = 0xc000, scoped, tag = 'scratch operand']
  #allocation3 [shape = 'f32[3,18,18]{2,1,0:T(8,128)}', space=vmem, size = 0x9000, scoped, tag = 'scratch operand']
  #allocation4 [shape = 'f32[1]{0:T(128)S(6)}', space=smem, size = 0x200, scoped, tag = 'scoped memory for tpu_custom_call.1']
  %s0 = inlined_call_operand.hbm [shape: f32[2,4,16,16], index: 0, kind: input, shape index: {}]
  %s1 = inlined_call_operand.vmem [shape: f32[108], index: 1, kind: input, shape index: {}]
  %s2 = inlined_call_operand.vmem [shape: f32[3], index: 2, kind: input, shape index: {}]
  %s3 = inlined_call_operand.<no memory space> [shape: f32[1], index: 3, kind: input, shape index: {}]
  %s4 = inlined_call_operand.vmem [shape: f32[27], index: 4, kind: input, shape index: {}]
  %s5 = inlined_call_operand.hbm [shape: f32[2,1,16,16], index: 5, kind: output, shape index: {}]
  %s6 = sld [smem:[#allocation0]]
  $region69: #{tpu_custom_call.1} parent=0
    _
  %s8 = ssub.s32 1, %s6
  %s9 = scalar_select 0, %s8, %s6
  %10 = sst [smem:[#allocation4]] %s3
  $region1: #{tpu_custom_call.1} parent=0
    #allocation5 [shape = 'u8[65536]{0}', space=vmem, size = 0x10000, scoped, tag = 'input window, operand 0']
    #allocation6 [shape = 's32[2]{0}', space=sflag, size = 0x8, scoped, tag = 'scoped memory for tpu_custom_call.1']
    #allocation7 [shape = 's32[2]{0}', space=sflag, size = 0x8, scoped, tag = 'scoped memory for tpu_custom_call.1']
    #allocation8 [shape = 's32[2]{0}', space=sflag, size = 0x8, scoped, tag = 'scoped memory for tpu_custom_call.1']
    #allocation9 [shape = 'u8[512]{0}', space=smem, size = 0x200, scoped, tag = 'input window, operand 1, single buffered']
    #allocation10 [shape = 'u8[512]{0}', space=smem, size = 0x200, scoped, tag = 'input window, operand 2, single buffered']
    #allocation11 [shape = 's32[1]{0}', space=sflag, size = 0x4, scoped, tag = 'scoped memory for tpu_custom_call.1']
    #allocation12 [shape = 'u8[512]{0}', space=smem, size = 0x200, scoped, tag = 'input window, operand 4, single buffered']
    #allocation13 [shape = 'u8[16384]{0}', space=vmem, size = 0x4000, scoped, tag = 'output window, operand 0']
    %11 = vsyncpa [#allocation6], 0
    %s12 = scalar_lea.sflag [#allocation6], 1
    %13 = vsyncpa %s12, 0
    %14 = vsyncpa [#allocation8], 0
    %15 = vsyncpa [#allocation11], 0
    %16 = vsyncpa [#allocation7], 0
    %s17 = scalar_lea.sflag [#allocation7], 1
    %18 = vsyncpa %s17, 0
    loop: start=0, step=1, limit=4
    $region2: #{tpu_custom_call.1} parent=1 // loop_pre_header
      _
    $region3: #{tpu_custom_call.1} parent=1 // loop_header
      %s20 = sphi 0, %s24
      %p21 = scmp.ge.s32.totalorder %s20, 4
      %s30 = sphi 0, %s32
      %s33 = sphi 0, %s30
      %s34 = sphi 0, %s33
      %s50 = sphi 0, %s34
      %s54 = sphi 0, %s54
      %s56 = sphi 0, %s54
      %s57 = sphi 0, %s56
      %s71 = sphi 0, %s57
      %s75 = sphi 0, %s75
      %s77 = sphi 0, %s75
      %s78 = sphi 0, %s77
      %s92 = sphi 0, %s78
      %s96 = sphi 0, %s96
      %s98 = sphi 0, %s96
      %s99 = sphi 0, %s98
      %s113 = sphi 0, %s99
      %s117 = sphi 0, %s117
      %s119 = sphi 0, %s117
      %s120 = sphi 0, %s119
      %s134 = sphi 0, %s120
      %s140 = sphi 0, %s142
      %s143 = sphi 0, %s140
      %s144 = sphi 0, %s143
      %s160 = sphi 0, %s144
    $region4: #{tpu_custom_call.1} parent=1 // loop_header_branch
      %23 = sbr.rel (%p21) target = $region8
    $region5: #{tpu_custom_call.1} parent=1 // loop_body
      %s25 = ssub.s32 %s20, 1
      %s26 = ssub.s32 %s20, 2
      %s27 = sadd.s32 %s20, 1
      %s28 = ssub.s32 %s20, %s27
      %p29 = scmp.eq.s32.totalorder %s28, 0
      %s31 = sadd.s32 %s30, 1
      %s32 = scalar_select %p29, %s30, %s31
      %p35 = pneg %p29
      %p36 = scmp.eq.s32.totalorder %s20, 1
      %p37 = por %p35, %p36
      %p38 = scmp.ne.s32.totalorder %s30, %s33
      %p39 = scmp.eq.s32.totalorder %s20, 0
      %p40 = por %p38, %p39
      %p41 = scmp.ne.s32.totalorder %s30, %s33
      %p42 = scmp.eq.s32.totalorder %s25, 1
      %p43 = por %p41, %p42
      %p44 = scmp.ne.s32.totalorder %s33, %s34
      %p45 = scmp.eq.s32.totalorder %s25, 0
      %p46 = por %p44, %p45
      %p47 = scmp.ne.s32.totalorder %s33, %s34
      %p48 = scmp.eq.s32.totalorder %s26, 1
      %p49 = por %p47, %p48
      %p51 = scmp.ne.s32.totalorder %s34, %s50
      %p52 = scmp.eq.s32.totalorder %s26, 0
      %p53 = por %p51, %p52
      %s55 = sadd.s32 %s54, 1
      %p58 = scmp.eq.s32.totalorder %s20, 1
      %p59 = scmp.ne.s32.totalorder %s54, %s56
      %p60 = scmp.eq.s32.totalorder %s20, 0
      %p61 = por %p59, %p60
      %p62 = scmp.ne.s32.totalorder %s54, %s56
      %p63 = scmp.eq.s32.totalorder %s25, 1
      %p64 = por %p62, %p63
      %p65 = scmp.ne.s32.totalorder %s56, %s57
      %p66 = scmp.eq.s32.totalorder %s25, 0
      %p67 = por %p65, %p66
      %p68 = scmp.ne.s32.totalorder %s56, %s57
      %p69 = scmp.eq.s32.totalorder %s26, 1
      %p70 = por %p68, %p69
      %p72 = scmp.ne.s32.totalorder %s57, %s71
      %p73 = scmp.eq.s32.totalorder %s26, 0
      %p74 = por %p72, %p73
      %s76 = sadd.s32 %s75, 1
      %p79 = scmp.eq.s32.totalorder %s20, 1
      %p80 = scmp.ne.s32.totalorder %s75, %s77
      %p81 = scmp.eq.s32.totalorder %s20, 0
      %p82 = por %p80, %p81
      %p83 = scmp.ne.s32.totalorder %s75, %s77
      %p84 = scmp.eq.s32.totalorder %s25, 1
      %p85 = por %p83, %p84
      %p86 = scmp.ne.s32.totalorder %s77, %s78
      %p87 = scmp.eq.s32.totalorder %s25, 0
      %p88 = por %p86, %p87
      %p89 = scmp.ne.s32.totalorder %s77, %s78
      %p90 = scmp.eq.s32.totalorder %s26, 1
      %p91 = por %p89, %p90
      %p93 = scmp.ne.s32.totalorder %s78, %s92
      %p94 = scmp.eq.s32.totalorder %s26, 0
      %p95 = por %p93, %p94
      %s97 = sadd.s32 %s96, 1
      %p100 = scmp.eq.s32.totalorder %s20, 1
      %p101 = scmp.ne.s32.totalorder %s96, %s98
      %p102 = scmp.eq.s32.totalorder %s20, 0
      %p103 = por %p101, %p102
      %p104 = scmp.ne.s32.totalorder %s96, %s98
      %p105 = scmp.eq.s32.totalorder %s25, 1
      %p106 = por %p104, %p105
      %p107 = scmp.ne.s32.totalorder %s98, %s99
      %p108 = scmp.eq.s32.totalorder %s25, 0
      %p109 = por %p107, %p108
      %p110 = scmp.ne.s32.totalorder %s98, %s99
      %p111 = scmp.eq.s32.totalorder %s26, 1
      %p112 = por %p110, %p111
      %p114 = scmp.ne.s32.totalorder %s99, %s113
      %p115 = scmp.eq.s32.totalorder %s26, 0
      %p116 = por %p114, %p115
      %s118 = sadd.s32 %s117, 1
      %p121 = scmp.eq.s32.totalorder %s20, 1
      %p122 = scmp.ne.s32.totalorder %s117, %s119
      %p123 = scmp.eq.s32.totalorder %s20, 0
      %p124 = por %p122, %p123
      %p125 = scmp.ne.s32.totalorder %s117, %s119
      %p126 = scmp.eq.s32.totalorder %s25, 1
      %p127 = por %p125, %p126
      %p128 = scmp.ne.s32.totalorder %s119, %s120
      %p129 = scmp.eq.s32.totalorder %s25, 0
      %p130 = por %p128, %p129
      %p131 = scmp.ne.s32.totalorder %s119, %s120
      %p132 = scmp.eq.s32.totalorder %s26, 1
      %p133 = por %p131, %p132
      %p135 = scmp.ne.s32.totalorder %s120, %s134
      %p136 = scmp.eq.s32.totalorder %s26, 0
      %p137 = por %p135, %p136
      %s138 = ssub.s32 %s20, %s27
      %p139 = scmp.eq.s32.totalorder %s138, 0
      %s141 = sadd.s32 %s140, 1
      %s142 = scalar_select %p139, %s140, %s141
      %p145 = pneg %p139
      %p146 = scmp.eq.s32.totalorder %s20, 1
      %p147 = por %p145, %p146
      %p148 = scmp.ne.s32.totalorder %s140, %s143
      %p149 = scmp.eq.s32.totalorder %s20, 0
      %p150 = por %p148, %p149
      %p151 = scmp.ne.s32.totalorder %s140, %s143
      %p152 = scmp.eq.s32.totalorder %s25, 1
      %p153 = por %p151, %p152
      %p154 = scmp.ne.s32.totalorder %s143, %s144
      %p155 = scmp.eq.s32.totalorder %s25, 0
      %p156 = por %p154, %p155
      %p157 = scmp.ne.s32.totalorder %s143, %s144
      %p158 = scmp.eq.s32.totalorder %s26, 1
      %p159 = por %p157, %p158
      %p161 = scmp.ne.s32.totalorder %s144, %s160
      %p162 = scmp.eq.s32.totalorder %s26, 0
      %p163 = por %p161, %p162
      %p164 = scmp.le.s32.totalorder 1, %s20
      %p165 = scmp.lt.s32.totalorder %s20, 3
      %p166 = pnand %p164, %p165
      %p167 = pneg %p166
      // Predicated region
      $region9: #{tpu_custom_call.1} parent=5 // pred_check
        _
      $region10: #{tpu_custom_call.1} parent=5 // pred_check_branch
        %169 = sbr.rel (%p166) target = $region12
      $region11: #{tpu_custom_call.1} parent=5 // pred_region
        %s170 = ssub.s32 %s20, 1
        // Predicated region
        $region13: #{tpu_custom_call.1} parent=11 // pred_check
          %p171 = pneg %p67
        $region14: #{tpu_custom_call.1} parent=11 // pred_check_branch
          %173 = sbr.rel (%p171) target = $region16
        $region15: #{tpu_custom_call.1} parent=11 // pred_region
          %s175 = ssub.s32 16, 16
          %176 = vsyncadd [#allocation8], %s175
          %s178 = sshll.u32 %s1, 4
          %s179 = int_to_ptr.vmem [resolvable:$true] %s178
          %181 = dma.vmem_to_smem %s179, 16, [#allocation9], [#allocation8]
        $region16: #{tpu_custom_call.1} parent=11 // pred_fallthru
          _
        // Predicated region
        $region17: #{tpu_custom_call.1} parent=11 // pred_check
          %p182 = pneg %p88
        $region18: #{tpu_custom_call.1} parent=11 // pred_check_branch
          %184 = sbr.rel (%p182) target = $region20
        $region19: #{tpu_custom_call.1} parent=11 // pred_region
          %s186 = ssub.s32 16, 16
          %187 = vsyncadd [#allocation11], %s186
          %s189 = sshll.u32 %s2, 4
          %s190 = int_to_ptr.vmem [resolvable:$true] %s189
          %192 = dma.vmem_to_smem %s190, 16, [#allocation10], [#allocation11]
        $region20: #{tpu_custom_call.1} parent=11 // pred_fallthru
          _
        // Predicated region
        $region21: #{tpu_custom_call.1} parent=11 // pred_check
          %p193 = pneg %p109
        $region22: #{tpu_custom_call.1} parent=11 // pred_check_branch
          %195 = sbr.rel (%p193) target = $region24
        $region23: #{tpu_custom_call.1} parent=11 // pred_region
          _
        $region24: #{tpu_custom_call.1} parent=11 // pred_fallthru
          _
        // Predicated region
        $region25: #{tpu_custom_call.1} parent=11 // pred_check
          %p196 = pneg %p130
        $region26: #{tpu_custom_call.1} parent=11 // pred_check_branch
          %198 = sbr.rel (%p196) target = $region28
        $region27: #{tpu_custom_call.1} parent=11 // pred_region
          %s200 = ssub.s32 16, 16
          %201 = vsyncadd [#allocation11], %s200
          %s203 = sshll.u32 %s4, 4
          %s204 = int_to_ptr.vmem [resolvable:$true] %s203
          %206 = dma.vmem_to_smem %s204, 16, [#allocation12], [#allocation11]
        $region28: #{tpu_custom_call.1} parent=11 // pred_fallthru
          _
      $region12: #{tpu_custom_call.1} parent=5 // pred_fallthru
        _
      %p207 = scmp.lt.s32.totalorder %s20, 2
      // Predicated region
      $region29: #{tpu_custom_call.1} parent=5 // pred_check
        %p208 = pneg %p207
      $region30: #{tpu_custom_call.1} parent=5 // pred_check_branch
        %210 = sbr.rel (%p208) target = $region32
      $region31: #{tpu_custom_call.1} parent=5 // pred_region
        // Predicated region
        $region33: #{tpu_custom_call.1} parent=31 // pred_check
          %p211 = pneg %p40
        $region34: #{tpu_custom_call.1} parent=31 // pred_check_branch
          %213 = sbr.rel (%p211) target = $region36
        $region35: #{tpu_custom_call.1} parent=31 // pred_region
          %s214 = sand.u32 %s30, 1
          %s215 = scalar_lea.sflag [#allocation6], %s214
          %s216 = sand.u32 %s30, 1
          %s217 = smul.addr %s216, 64
          %s218 = scalar_lea.vmem [#allocation5], %s217
          %s220 = ssub.s32 1024, 1024
          %221 = vsyncadd %s215, %s220
          %s222 = smul.addr %s20, 8
          %s223 = smul.addr %s222, 128
          %s224 = scalar_lea.hbm %s0, %s223
          %s225 = sshll.u32 %s218, 4
          %s226 = int_to_ptr.vmem [resolvable:$true] %s225
          %231 = dma.hbm_to_vmem [thread:$0]  %s224, 1024, %s226, %s215, 128, 128, 8
        $region36: #{tpu_custom_call.1} parent=31 // pred_fallthru
          _
      $region32: #{tpu_custom_call.1} parent=5 // pred_fallthru
        _
      %p232 = scmp.le.s32.totalorder 1, %s20
      %p233 = scmp.lt.s32.totalorder %s20, 3
      %p234 = pnand %p232, %p233
      %p235 = pneg %p234
      // Predicated region
      $region37: #{tpu_custom_call.1} parent=5 // pred_check
        _
      $region38: #{tpu_custom_call.1} parent=5 // pred_check_branch
        %237 = sbr.rel (%p234) target = $region40
      $region39: #{tpu_custom_call.1} parent=5 // pred_region
        %s238 = ssub.s32 %s20, 1
        %s239 = sand.u32 %s33, 1
        %s240 = scalar_lea.sflag [#allocation6], %s239
        %s241 = sand.u32 %s33, 1
        %s242 = smul.addr %s241, 64
        %s243 = scalar_lea.vmem [#allocation5], %s242
        // Predicated region
        $region41: #{tpu_custom_call.1} parent=39 // pred_check
          %p244 = pneg %p46
        $region42: #{tpu_custom_call.1} parent=39 // pred_check_branch
          %246 = sbr.rel (%p244) target = $region44
        $region43: #{tpu_custom_call.1} parent=39 // pred_region
          %247 = dma.done %s240, 1024
        $region44: #{tpu_custom_call.1} parent=39 // pred_fallthru
          _
        // Predicated region
        $region45: #{tpu_custom_call.1} parent=39 // pred_check
          %p248 = pneg %p67
        $region46: #{tpu_custom_call.1} parent=39 // pred_check_branch
          %250 = sbr.rel (%p248) target = $region48
        $region47: #{tpu_custom_call.1} parent=39 // pred_region
          %251 = dma.done [#allocation8], 16
        $region48: #{tpu_custom_call.1} parent=39 // pred_fallthru
          _
        // Predicated region
        $region49: #{tpu_custom_call.1} parent=39 // pred_check
          %p252 = pneg %p88
        $region50: #{tpu_custom_call.1} parent=39 // pred_check_branch
          %254 = sbr.rel (%p252) target = $region52
        $region51: #{tpu_custom_call.1} parent=39 // pred_region
          %255 = dma.done [#allocation11], 16
        $region52: #{tpu_custom_call.1} parent=39 // pred_fallthru
          _
        // Predicated region
        $region53: #{tpu_custom_call.1} parent=39 // pred_check
          %p256 = pneg %p130
        $region54: #{tpu_custom_call.1} parent=39 // pred_check_branch
          %258 = sbr.rel (%p256) target = $region56
        $region55: #{tpu_custom_call.1} parent=39 // pred_region
          %259 = dma.done [#allocation11], 16
        $region56: #{tpu_custom_call.1} parent=39 // pred_fallthru
          _
        %260 = sfence
        %s261 = sand.u32 %s33, 1
        %s262 = scalar_lea.sflag [#allocation6], %s261
        %s263 = sand.u32 %s33, 1
        %s264 = smul.addr %s263, 64
        %s265 = scalar_lea.vmem [#allocation5], %s264
        %p266 = pneg %p46
        %p267 = pneg %p43
        %p268 = pneg %p67
        %p269 = pneg %p64
        %p270 = pneg %p88
        %p271 = pneg %p85
        %p272 = pneg %p109
        %p273 = pneg %p106
        %p274 = pneg %p130
        %p275 = pneg %p127
        %p276 = pneg %p156
        %p277 = pneg %p153
        %s278 = sand.u32 %s143, 1
        %s279 = scalar_lea.sflag [#allocation7], %s278
        %s280 = sand.u32 %s143, 1
        %s281 = smul.addr %s280, 16
        %s282 = scalar_lea.vmem [#allocation13], %s281
        %vm283 = vcmask 139264
        %284 = vst.msk [vmem:[#allocation2] sm:$0x1] %vm283, 0.0
        %285 = vst.msk [vmem:[#allocation2 + $0x18] sm:$0x1] %vm283, 0.0
        %286 = vst.msk [vmem:[#allocation2 + $0x30] sm:$0x1] %vm283, 0.0
        %287 = vst.msk [vmem:[#allocation2 + $0x48] sm:$0x1] %vm283, 0.0
        %288 = vst.msk [vmem:[#allocation2 + $0x11] sm:$0x1] %vm283, 0.0
        %289 = vst.msk [vmem:[#allocation2 + $0x29] sm:$0x1] %vm283, 0.0
        %290 = vst.msk [vmem:[#allocation2 + $0x41] sm:$0x1] %vm283, 0.0
        %291 = vst.msk [vmem:[#allocation2 + $0x59] sm:$0x1] %vm283, 0.0
        %vm292 = vcmask 7168
        %293 = vst.msk [vmem:[#allocation2] sm:$0xff] %vm292, 0.0
        %294 = vst.msk [vmem:[#allocation2 + $0x8] sm:$0xff] %vm292, 0.0
        %vm295 = vcmask 1024
        %296 = vst.msk [vmem:[#allocation2 + $0x10] sm:$0x3] %vm295, 0.0
        %297 = vst.msk [vmem:[#allocation2 + $0x18] sm:$0xff] %vm292, 0.0
        %298 = vst.msk [vmem:[#allocation2 + $0x20] sm:$0xff] %vm292, 0.0
        %299 = vst.msk [vmem:[#allocation2 + $0x28] sm:$0x3] %vm295, 0.0
        %300 = vst.msk [vmem:[#allocation2 + $0x30] sm:$0xff] %vm292, 0.0
        %301 = vst.msk [vmem:[#allocation2 + $0x38] sm:$0xff] %vm292, 0.0
        %302 = vst.msk [vmem:[#allocation2 + $0x40] sm:$0x3] %vm295, 0.0
        %303 = vst.msk [vmem:[#allocation2 + $0x48] sm:$0xff] %vm292, 0.0
        %304 = vst.msk [vmem:[#allocation2 + $0x50] sm:$0xff] %vm292, 0.0
        %305 = vst.msk [vmem:[#allocation2 + $0x58] sm:$0x3] %vm295, 0.0
        %vm306 = vcmask 146568
        %307 = vst.msk [vmem:[#allocation2] sm:$0xff] %vm306, 0.0
        %308 = vst.msk [vmem:[#allocation2 + $0x8] sm:$0xff] %vm306, 0.0
        %vm309 = vcmask 140424
        %310 = vst.msk [vmem:[#allocation2 + $0x10] sm:$0x3] %vm309, 0.0
        %311 = vst.msk [vmem:[#allocation2 + $0x18] sm:$0xff] %vm306, 0.0
        %312 = vst.msk [vmem:[#allocation2 + $0x20] sm:$0xff] %vm306, 0.0
        %313 = vst.msk [vmem:[#allocation2 + $0x28] sm:$0x3] %vm309, 0.0
        %314 = vst.msk [vmem:[#allocation2 + $0x30] sm:$0xff] %vm306, 0.0
        %315 = vst.msk [vmem:[#allocation2 + $0x38] sm:$0xff] %vm306, 0.0
        %316 = vst.msk [vmem:[#allocation2 + $0x40] sm:$0x3] %vm309, 0.0
        %317 = vst.msk [vmem:[#allocation2 + $0x48] sm:$0xff] %vm306, 0.0
        %318 = vst.msk [vmem:[#allocation2 + $0x50] sm:$0xff] %vm306, 0.0
        %319 = vst.msk [vmem:[#allocation2 + $0x58] sm:$0x3] %vm309, 0.0
        %320 = vst.msk [vmem:[#allocation3] sm:$0x1] %vm283, 0.0
        %321 = vst.msk [vmem:[#allocation3 + $0x18] sm:$0x1] %vm283, 0.0
        %322 = vst.msk [vmem:[#allocation3 + $0x30] sm:$0x1] %vm283, 0.0
        %323 = vst.msk [vmem:[#allocation3 + $0x11] sm:$0x1] %vm283, 0.0
        %324 = vst.msk [vmem:[#allocation3 + $0x29] sm:$0x1] %vm283, 0.0
        %325 = vst.msk [vmem:[#allocation3 + $0x41] sm:$0x1] %vm283, 0.0
        %326 = vst.msk [vmem:[#allocation3] sm:$0xff] %vm292, 0.0
        %327 = vst.msk [vmem:[#allocation3 + $0x8] sm:$0xff] %vm292, 0.0
        %328 = vst.msk [vmem:[#allocation3 + $0x10] sm:$0x3] %vm295, 0.0
        %329 = vst.msk [vmem:[#allocation3 + $0x18] sm:$0xff] %vm292, 0.0
        %330 = vst.msk [vmem:[#allocation3 + $0x20] sm:$0xff] %vm292, 0.0
        %331 = vst.msk [vmem:[#allocation3 + $0x28] sm:$0x3] %vm295, 0.0
        %332 = vst.msk [vmem:[#allocation3 + $0x30] sm:$0xff] %vm292, 0.0
        %333 = vst.msk [vmem:[#allocation3 + $0x38] sm:$0xff] %vm292, 0.0
        %334 = vst.msk [vmem:[#allocation3 + $0x40] sm:$0x3] %vm295, 0.0
        %335 = vst.msk [vmem:[#allocation3] sm:$0xff] %vm306, 0.0
        %336 = vst.msk [vmem:[#allocation3 + $0x8] sm:$0xff] %vm306, 0.0
        %337 = vst.msk [vmem:[#allocation3 + $0x10] sm:$0x3] %vm309, 0.0
        %338 = vst.msk [vmem:[#allocation3 + $0x18] sm:$0xff] %vm306, 0.0
        %339 = vst.msk [vmem:[#allocation3 + $0x20] sm:$0xff] %vm306, 0.0
        %340 = vst.msk [vmem:[#allocation3 + $0x28] sm:$0x3] %vm309, 0.0
        %341 = vst.msk [vmem:[#allocation3 + $0x30] sm:$0xff] %vm306, 0.0
        %342 = vst.msk [vmem:[#allocation3 + $0x38] sm:$0xff] %vm306, 0.0
        %343 = vst.msk [vmem:[#allocation3 + $0x40] sm:$0x3] %vm309, 0.0
        %v344 = vld [vmem:[%s243] sm:$0xff]
        %v345 = vld [vmem:[%s243 + $0x8] sm:$0xff]
        %v346 = vld [vmem:[%s243 + $0x10] sm:$0xff]
        %v347 = vld [vmem:[%s243 + $0x18] sm:$0xff]
        %v348 = vld [vmem:[%s243 + $0x20] sm:$0xff]
        %v349 = vld [vmem:[%s243 + $0x28] sm:$0xff]
        %v350 = vld [vmem:[%s243 + $0x30] sm:$0xff]
        %v351 = vld [vmem:[%s243 + $0x38] sm:$0xff]
        %360 = vrot.lane.b32.xlu0 %v344, 1
        %v361 = vpop.permute.xlu0 %360
        %362 = vrot.lane.b32.xlu0 %v345, 1
        %v363 = vpop.permute.xlu0 %362
        %364 = vrot.lane.b32.xlu0 %v346, 1
        %v365 = vpop.permute.xlu0 %364
        %366 = vrot.lane.b32.xlu0 %v347, 1
        %v367 = vpop.permute.xlu0 %366
        %368 = vrot.lane.b32.xlu0 %v348, 1
        %v369 = vpop.permute.xlu0 %368
        %370 = vrot.lane.b32.xlu0 %v349, 1
        %v371 = vpop.permute.xlu0 %370
        %372 = vrot.lane.b32.xlu0 %v350, 1
        %v373 = vpop.permute.xlu0 %372
        %374 = vrot.lane.b32.xlu0 %v351, 1
        %v375 = vpop.permute.xlu0 %374
        %vm384 = vcmask 138248
        %385 = vst.msk [vmem:[#allocation2 + $0x1] sm:$0xff] %vm384, %v361
        %386 = vst.msk [vmem:[#allocation2 + $0x9] sm:$0xff] %vm384, %v363
        %387 = vst.msk [vmem:[#allocation2 + $0x19] sm:$0xff] %vm384, %v365
        %388 = vst.msk [vmem:[#allocation2 + $0x21] sm:$0xff] %vm384, %v367
        %389 = vst.msk [vmem:[#allocation2 + $0x31] sm:$0xff] %vm384, %v369
        %390 = vst.msk [vmem:[#allocation2 + $0x39] sm:$0xff] %vm384, %v371
        %391 = vst.msk [vmem:[#allocation2 + $0x49] sm:$0xff] %vm384, %v373
        %392 = vst.msk [vmem:[#allocation2 + $0x51] sm:$0xff] %vm384, %v375
        %s393 = sld [smem:[#allocation10]]
        %v394 = vstv %s393
        %s395 = sld [smem:[#allocation10 + $0x1]]
        %v396 = vstv %s395
        %s397 = sld [smem:[#allocation10 + $0x2]]
        %v398 = vstv %s397
        %v399 = vld [vmem:[#allocation2] sm:$0xff]
        %v400 = vld [vmem:[#allocation2 + $0x8] sm:$0xff]
        %s401 = sld [smem:[#allocation9]]
        %v402 = vstv %s401
        %v403 = vmul.f32 %v399, %v402
        %v404 = vmul.f32 %v400, %v402
        %v405 = vadd.f32 %v394, %v403
        %v406 = vadd.f32 %v394, %v404
        %s407 = sld [smem:[#allocation9 + $0x24]]
        %v408 = vstv %s407
        %v409 = vmul.f32 %v399, %v408
        %v410 = vmul.f32 %v400, %v408
        %v411 = vadd.f32 %v396, %v409
        %v412 = vadd.f32 %v396, %v410
        %s413 = sld [smem:[#allocation9 + $0x48]]
        %v414 = vstv %s413
        %v415 = vmul.f32 %v399, %v414
        %v416 = vmul.f32 %v400, %v414
        %v417 = vadd.f32 %v398, %v415
        %v418 = vadd.f32 %v398, %v416
        %s419 = sld [smem:[#allocation9 + $0x1]]
        %v420 = vstv %s419
        %v421 = vmul.f32 %v399, %v420
        %v422 = vmul.f32 %v400, %v420
        %425 = vrot.lane.b32.xlu0 %v421, 127
        %v426 = vpop.permute.xlu0 %425
        %427 = vrot.lane.b32.xlu0 %v422, 127
        %v428 = vpop.permute.xlu0 %427
        %v431 = vadd.f32 %v405, %v426
        %v432 = vadd.f32 %v406, %v428
        %s433 = sld [smem:[#allocation9 + $0x25]]
        %v434 = vstv %s433
        %v435 = vmul.f32 %v399, %v434
        %v436 = vmul.f32 %v400, %v434
        %439 = vrot.lane.b32.xlu0 %v435, 127
        %v440 = vpop.permute.xlu0 %439
        %441 = vrot.lane.b32.xlu0 %v436, 127
        %v442 = vpop.permute.xlu0 %441
        %v445 = vadd.f32 %v411, %v440
        %v446 = vadd.f32 %v412, %v442
        %s447 = sld [smem:[#allocation9 + $0x49]]
        %v448 = vstv %s447
        %v449 = vmul.f32 %v399, %v448
        %v450 = vmul.f32 %v400, %v448
        %453 = vrot.lane.b32.xlu0 %v449, 127
        %v454 = vpop.permute.xlu0 %453
        %455 = vrot.lane.b32.xlu0 %v450, 127
        %v456 = vpop.permute.xlu0 %455
        %v459 = vadd.f32 %v417, %v454
        %v460 = vadd.f32 %v418, %v456
        %s461 = sld [smem:[#allocation9 + $0x2]]
        %v462 = vstv %s461
        %v463 = vmul.f32 %v399, %v462
        %v464 = vmul.f32 %v400, %v462
        %467 = vrot.lane.b32.xlu0 %v463, 126
        %v468 = vpop.permute.xlu0 %467
        %469 = vrot.lane.b32.xlu0 %v464, 126
        %v470 = vpop.permute.xlu0 %469
        %v473 = vadd.f32 %v431, %v468
        %v474 = vadd.f32 %v432, %v470
        %s475 = sld [smem:[#allocation9 + $0x26]]
        %v476 = vstv %s475
        %v477 = vmul.f32 %v399, %v476
        %v478 = vmul.f32 %v400, %v476
        %481 = vrot.lane.b32.xlu0 %v477, 126
        %v482 = vpop.permute.xlu0 %481
        %483 = vrot.lane.b32.xlu0 %v478, 126
        %v484 = vpop.permute.xlu0 %483
        %v487 = vadd.f32 %v445, %v482
        %v488 = vadd.f32 %v446, %v484
        %s489 = sld [smem:[#allocation9 + $0x4a]]
        %v490 = vstv %s489
        %v491 = vmul.f32 %v399, %v490
        %v492 = vmul.f32 %v400, %v490
        %495 = vrot.lane.b32.xlu0 %v491, 126
        %v496 = vpop.permute.xlu0 %495
        %497 = vrot.lane.b32.xlu0 %v492, 126
        %v498 = vpop.permute.xlu0 %497
        %v501 = vadd.f32 %v459, %v496
        %v502 = vadd.f32 %v460, %v498
        %v503 = vld [vmem:[#allocation2 + $0x1] sm:$0xff]
        %v504 = vld [vmem:[#allocation2 + $0x9] sm:$0xff]
        %s505 = sld [smem:[#allocation9 + $0x3]]
        %v506 = vstv %s505
        %v507 = vmul.f32 %v503, %v506
        %v508 = vmul.f32 %v504, %v506
        %v509 = vadd.f32 %v473, %v507
        %v510 = vadd.f32 %v474, %v508
        %s511 = sld [smem:[#allocation9 + $0x27]]
        %v512 = vstv %s511
        %v513 = vmul.f32 %v503, %v512
        %v514 = vmul.f32 %v504, %v512
        %v515 = vadd.f32 %v487, %v513
        %v516 = vadd.f32 %v488, %v514
        %s517 = sld [smem:[#allocation9 + $0x4b]]
        %v518 = vstv %s517
        %v519 = vmul.f32 %v503, %v518
        %v520 = vmul.f32 %v504, %v518
        %v521 = vadd.f32 %v501, %v519
        %v522 = vadd.f32 %v502, %v520
        %s523 = sld [smem:[#allocation9 + $0x4]]
        %v524 = vstv %s523
        %v525 = vmul.f32 %v503, %v524
        %v526 = vmul.f32 %v504, %v524
        %529 = vrot.lane.b32.xlu0 %v525, 127
        %v530 = vpop.permute.xlu0 %529
        %531 = vrot.lane.b32.xlu0 %v526, 127
        %v532 = vpop.permute.xlu0 %531
        %v535 = vadd.f32 %v509, %v530
        %v536 = vadd.f32 %v510, %v532
        %s537 = sld [smem:[#allocation9 + $0x28]]
        %v538 = vstv %s537
        %v539 = vmul.f32 %v503, %v538
        %v540 = vmul.f32 %v504, %v538
        %543 = vrot.lane.b32.xlu0 %v539, 127
        %v544 = vpop.permute.xlu0 %543
        %545 = vrot.lane.b32.xlu0 %v540, 127
        %v546 = vpop.permute.xlu0 %545
        %v549 = vadd.f32 %v515, %v544
        %v550 = vadd.f32 %v516, %v546
        %s551 = sld [smem:[#allocation9 + $0x4c]]
        %v552 = vstv %s551
        %v553 = vmul.f32 %v503, %v552
        %v554 = vmul.f32 %v504, %v552
        %557 = vrot.lane.b32.xlu0 %v553, 127
        %v558 = vpop.permute.xlu0 %557
        %559 = vrot.lane.b32.xlu0 %v554, 127
        %v560 = vpop.permute.xlu0 %559
        %v563 = vadd.f32 %v521, %v558
        %v564 = vadd.f32 %v522, %v560
        %s565 = sld [smem:[#allocation9 + $0x5]]
        %v566 = vstv %s565
        %v567 = vmul.f32 %v503, %v566
        %v568 = vmul.f32 %v504, %v566
        %571 = vrot.lane.b32.xlu0 %v567, 126
        %v572 = vpop.permute.xlu0 %571
        %573 = vrot.lane.b32.xlu0 %v568, 126
        %v574 = vpop.permute.xlu0 %573
        %v577 = vadd.f32 %v535, %v572
        %v578 = vadd.f32 %v536, %v574
        %s579 = sld [smem:[#allocation9 + $0x29]]
        %v580 = vstv %s579
        %v581 = vmul.f32 %v503, %v580
        %v582 = vmul.f32 %v504, %v580
        %585 = vrot.lane.b32.xlu0 %v581, 126
        %v586 = vpop.permute.xlu0 %585
        %587 = vrot.lane.b32.xlu0 %v582, 126
        %v588 = vpop.permute.xlu0 %587
        %v591 = vadd.f32 %v549, %v586
        %v592 = vadd.f32 %v550, %v588
        %s593 = sld [smem:[#allocation9 + $0x4d]]
        %v594 = vstv %s593
        %v595 = vmul.f32 %v503, %v594
        %v596 = vmul.f32 %v504, %v594
        %599 = vrot.lane.b32.xlu0 %v595, 126
        %v600 = vpop.permute.xlu0 %599
        %601 = vrot.lane.b32.xlu0 %v596, 126
        %v602 = vpop.permute.xlu0 %601
        %v605 = vadd.f32 %v563, %v600
        %v606 = vadd.f32 %v564, %v602
        %v607 = vld [vmem:[#allocation2 + $0x2] sm:$0xff]
        %v608 = vld [vmem:[#allocation2 + $0xa] sm:$0xff]
        %s609 = sld [smem:[#allocation9 + $0x6]]
        %v610 = vstv %s609
        %v611 = vmul.f32 %v607, %v610
        %v612 = vmul.f32 %v608, %v610
        %v613 = vadd.f32 %v577, %v611
        %v614 = vadd.f32 %v578, %v612
        %s615 = sld [smem:[#allocation9 + $0x2a]]
        %v616 = vstv %s615
        %v617 = vmul.f32 %v607, %v616
        %v618 = vmul.f32 %v608, %v616
        %v619 = vadd.f32 %v591, %v617
        %v620 = vadd.f32 %v592, %v618
        %s621 = sld [smem:[#allocation9 + $0x4e]]
        %v622 = vstv %s621
        %v623 = vmul.f32 %v607, %v622
        %v624 = vmul.f32 %v608, %v622
        %v625 = vadd.f32 %v605, %v623
        %v626 = vadd.f32 %v606, %v624
        %s627 = sld [smem:[#allocation9 + $0x7]]
        %v628 = vstv %s627
        %v629 = vmul.f32 %v607, %v628
        %v630 = vmul.f32 %v608, %v628
        %633 = vrot.lane.b32.xlu0 %v629, 127
        %v634 = vpop.permute.xlu0 %633
        %635 = vrot.lane.b32.xlu0 %v630, 127
        %v636 = vpop.permute.xlu0 %635
        %v639 = vadd.f32 %v613, %v634
        %v640 = vadd.f32 %v614, %v636
        %s641 = sld [smem:[#allocation9 + $0x2b]]
        %v642 = vstv %s641
        %v643 = vmul.f32 %v607, %v642
        %v644 = vmul.f32 %v608, %v642
        %647 = vrot.lane.b32.xlu0 %v643, 127
        %v648 = vpop.permute.xlu0 %647
        %649 = vrot.lane.b32.xlu0 %v644, 127
        %v650 = vpop.permute.xlu0 %649
        %v653 = vadd.f32 %v619, %v648
        %v654 = vadd.f32 %v620, %v650
        %s655 = sld [smem:[#allocation9 + $0x4f]]
        %v656 = vstv %s655
        %v657 = vmul.f32 %v607, %v656
        %v658 = vmul.f32 %v608, %v656
        %661 = vrot.lane.b32.xlu0 %v657, 127
        %v662 = vpop.permute.xlu0 %661
        %663 = vrot.lane.b32.xlu0 %v658, 127
        %v664 = vpop.permute.xlu0 %663
        %v667 = vadd.f32 %v625, %v662
        %v668 = vadd.f32 %v626, %v664
        %s669 = sld [smem:[#allocation9 + $0x8]]
        %v670 = vstv %s669
        %v671 = vmul.f32 %v607, %v670
        %v672 = vmul.f32 %v608, %v670
        %675 = vrot.lane.b32.xlu0 %v671, 126
        %v676 = vpop.permute.xlu0 %675
        %677 = vrot.lane.b32.xlu0 %v672, 126
        %v678 = vpop.permute.xlu0 %677
        %v681 = vadd.f32 %v639, %v676
        %v682 = vadd.f32 %v640, %v678
        %s683 = sld [smem:[#allocation9 + $0x2c]]
        %v684 = vstv %s683
        %v685 = vmul.f32 %v607, %v684
        %v686 = vmul.f32 %v608, %v684
        %689 = vrot.lane.b32.xlu0 %v685, 126
        %v690 = vpop.permute.xlu0 %689
        %691 = vrot.lane.b32.xlu0 %v686, 126
        %v692 = vpop.permute.xlu0 %691
        %v695 = vadd.f32 %v653, %v690
        %v696 = vadd.f32 %v654, %v692
        %s697 = sld [smem:[#allocation9 + $0x50]]
        %v698 = vstv %s697
        %v699 = vmul.f32 %v607, %v698
        %v700 = vmul.f32 %v608, %v698
        %703 = vrot.lane.b32.xlu0 %v699, 126
        %v704 = vpop.permute.xlu0 %703
        %705 = vrot.lane.b32.xlu0 %v700, 126
        %v706 = vpop.permute.xlu0 %705
        %v709 = vadd.f32 %v667, %v704
        %v710 = vadd.f32 %v668, %v706
        %s711 = scalar_lea.vmem [#allocation2], 24
        %v712 = vld [vmem:[%s711] sm:$0xff]
        %v713 = vld [vmem:[%s711 + $0x8] sm:$0xff]
        %s714 = sld [smem:[#allocation9 + $0x9]]
        %v715 = vstv %s714
        %v716 = vmul.f32 %v712, %v715
        %v717 = vmul.f32 %v713, %v715
        %v718 = vadd.f32 %v681, %v716
        %v719 = vadd.f32 %v682, %v717
        %s720 = sld [smem:[#allocation9 + $0x2d]]
        %v721 = vstv %s720
        %v722 = vmul.f32 %v712, %v721
        %v723 = vmul.f32 %v713, %v721
        %v724 = vadd.f32 %v695, %v722
        %v725 = vadd.f32 %v696, %v723
        %s726 = sld [smem:[#allocation9 + $0x51]]
        %v727 = vstv %s726
        %v728 = vmul.f32 %v712, %v727
        %v729 = vmul.f32 %v713, %v727
        %v730 = vadd.f32 %v709, %v728
        %v731 = vadd.f32 %v710, %v729
        %s732 = sld [smem:[#allocation9 + $0xa]]
        %v733 = vstv %s732
        %v734 = vmul.f32 %v712, %v733
        %v735 = vmul.f32 %v713, %v733
        %738 = vrot.lane.b32.xlu0 %v734, 127
        %v739 = vpop.permute.xlu0 %738
        %740 = vrot.lane.b32.xlu0 %v735, 127
        %v741 = vpop.permute.xlu0 %740
        %v744 = vadd.f32 %v718, %v739
        %v745 = vadd.f32 %v719, %v741
        %s746 = sld [smem:[#allocation9 + $0x2e]]
        %v747 = vstv %s746
        %v748 = vmul.f32 %v712, %v747
        %v749 = vmul.f32 %v713, %v747
        %752 = vrot.lane.b32.xlu0 %v748, 127
        %v753 = vpop.permute.xlu0 %752
        %754 = vrot.lane.b32.xlu0 %v749, 127
        %v755 = vpop.permute.xlu0 %754
        %v758 = vadd.f32 %v724, %v753
        %v759 = vadd.f32 %v725, %v755
        %s760 = sld [smem:[#allocation9 + $0x52]]
        %v761 = vstv %s760
        %v762 = vmul.f32 %v712, %v761
        %v763 = vmul.f32 %v713, %v761
        %766 = vrot.lane.b32.xlu0 %v762, 127
        %v767 = vpop.permute.xlu0 %766
        %768 = vrot.lane.b32.xlu0 %v763, 127
        %v769 = vpop.permute.xlu0 %768
        %v772 = vadd.f32 %v730, %v767
        %v773 = vadd.f32 %v731, %v769
        %s774 = sld [smem:[#allocation9 + $0xb]]
        %v775 = vstv %s774
        %v776 = vmul.f32 %v712, %v775
        %v777 = vmul.f32 %v713, %v775
        %780 = vrot.lane.b32.xlu0 %v776, 126
        %v781 = vpop.permute.xlu0 %780
        %782 = vrot.lane.b32.xlu0 %v777, 126
        %v783 = vpop.permute.xlu0 %782
        %v786 = vadd.f32 %v744, %v781
        %v787 = vadd.f32 %v745, %v783
        %s788 = sld [smem:[#allocation9 + $0x2f]]
        %v789 = vstv %s788
        %v790 = vmul.f32 %v712, %v789
        %v791 = vmul.f32 %v713, %v789
        %794 = vrot.lane.b32.xlu0 %v790, 126
        %v795 = vpop.permute.xlu0 %794
        %796 = vrot.lane.b32.xlu0 %v791, 126
        %v797 = vpop.permute.xlu0 %796
        %v800 = vadd.f32 %v758, %v795
        %v801 = vadd.f32 %v759, %v797
        %s802 = sld [smem:[#allocation9 + $0x53]]
        %v803 = vstv %s802
        %v804 = vmul.f32 %v712, %v803
        %v805 = vmul.f32 %v713, %v803
        %808 = vrot.lane.b32.xlu0 %v804, 126
        %v809 = vpop.permute.xlu0 %808
        %810 = vrot.lane.b32.xlu0 %v805, 126
        %v811 = vpop.permute.xlu0 %810
        %v814 = vadd.f32 %v772, %v809
        %v815 = vadd.f32 %v773, %v811
        %v816 = vld [vmem:[%s711 + $0x1] sm:$0xff]
        %v817 = vld [vmem:[%s711 + $0x9] sm:$0xff]
        %s818 = sld [smem:[#allocation9 + $0xc]]
        %v819 = vstv %s818
        %v820 = vmul.f32 %v816, %v819
        %v821 = vmul.f32 %v817, %v819
        %v822 = vadd.f32 %v786, %v820
        %v823 = vadd.f32 %v787, %v821
        %s824 = sld [smem:[#allocation9 + $0x30]]
        %v825 = vstv %s824
        %v826 = vmul.f32 %v816, %v825
        %v827 = vmul.f32 %v817, %v825
        %v828 = vadd.f32 %v800, %v826
        %v829 = vadd.f32 %v801, %v827
        %s830 = sld [smem:[#allocation9 + $0x54]]
        %v831 = vstv %s830
        %v832 = vmul.f32 %v816, %v831
        %v833 = vmul.f32 %v817, %v831
        %v834 = vadd.f32 %v814, %v832
        %v835 = vadd.f32 %v815, %v833
        %s836 = sld [smem:[#allocation9 + $0xd]]
        %v837 = vstv %s836
        %v838 = vmul.f32 %v816, %v837
        %v839 = vmul.f32 %v817, %v837
        %842 = vrot.lane.b32.xlu0 %v838, 127
        %v843 = vpop.permute.xlu0 %842
        %844 = vrot.lane.b32.xlu0 %v839, 127
        %v845 = vpop.permute.xlu0 %844
        %v848 = vadd.f32 %v822, %v843
        %v849 = vadd.f32 %v823, %v845
        %s850 = sld [smem:[#allocation9 + $0x31]]
        %v851 = vstv %s850
        %v852 = vmul.f32 %v816, %v851
        %v853 = vmul.f32 %v817, %v851
        %856 = vrot.lane.b32.xlu0 %v852, 127
        %v857 = vpop.permute.xlu0 %856
        %858 = vrot.lane.b32.xlu0 %v853, 127
        %v859 = vpop.permute.xlu0 %858
        %v862 = vadd.f32 %v828, %v857
        %v863 = vadd.f32 %v829, %v859
        %s864 = sld [smem:[#allocation9 + $0x55]]
        %v865 = vstv %s864
        %v866 = vmul.f32 %v816, %v865
        %v867 = vmul.f32 %v817, %v865
        %870 = vrot.lane.b32.xlu0 %v866, 127
        %v871 = vpop.permute.xlu0 %870
        %872 = vrot.lane.b32.xlu0 %v867, 127
        %v873 = vpop.permute.xlu0 %872
        %v876 = vadd.f32 %v834, %v871
        %v877 = vadd.f32 %v835, %v873
        %s878 = sld [smem:[#allocation9 + $0xe]]
        %v879 = vstv %s878
        %v880 = vmul.f32 %v816, %v879
        %v881 = vmul.f32 %v817, %v879
        %884 = vrot.lane.b32.xlu0 %v880, 126
        %v885 = vpop.permute.xlu0 %884
        %886 = vrot.lane.b32.xlu0 %v881, 126
        %v887 = vpop.permute.xlu0 %886
        %v890 = vadd.f32 %v848, %v885
        %v891 = vadd.f32 %v849, %v887
        %s892 = sld [smem:[#allocation9 + $0x32]]
        %v893 = vstv %s892
        %v894 = vmul.f32 %v816, %v893
        %v895 = vmul.f32 %v817, %v893
        %898 = vrot.lane.b32.xlu0 %v894, 126
        %v899 = vpop.permute.xlu0 %898
        %900 = vrot.lane.b32.xlu0 %v895, 126
        %v901 = vpop.permute.xlu0 %900
        %v904 = vadd.f32 %v862, %v899
        %v905 = vadd.f32 %v863, %v901
        %s906 = sld [smem:[#allocation9 + $0x56]]
        %v907 = vstv %s906
        %v908 = vmul.f32 %v816, %v907
        %v909 = vmul.f32 %v817, %v907
        %912 = vrot.lane.b32.xlu0 %v908, 126
        %v913 = vpop.permute.xlu0 %912
        %914 = vrot.lane.b32.xlu0 %v909, 126
        %v915 = vpop.permute.xlu0 %914
        %v918 = vadd.f32 %v876, %v913
        %v919 = vadd.f32 %v877, %v915
        %v920 = vld [vmem:[%s711 + $0x2] sm:$0xff]
        %v921 = vld [vmem:[%s711 + $0xa] sm:$0xff]
        %s922 = sld [smem:[#allocation9 + $0xf]]
        %v923 = vstv %s922
        %v924 = vmul.f32 %v920, %v923
        %v925 = vmul.f32 %v921, %v923
        %v926 = vadd.f32 %v890, %v924
        %v927 = vadd.f32 %v891, %v925
        %s928 = sld [smem:[#allocation9 + $0x33]]
        %v929 = vstv %s928
        %v930 = vmul.f32 %v920, %v929
        %v931 = vmul.f32 %v921, %v929
        %v932 = vadd.f32 %v904, %v930
        %v933 = vadd.f32 %v905, %v931
        %s934 = sld [smem:[#allocation9 + $0x57]]
        %v935 = vstv %s934
        %v936 = vmul.f32 %v920, %v935
        %v937 = vmul.f32 %v921, %v935
        %v938 = vadd.f32 %v918, %v936
        %v939 = vadd.f32 %v919, %v937
        %s940 = sld [smem:[#allocation9 + $0x10]]
        %v941 = vstv %s940
        %v942 = vmul.f32 %v920, %v941
        %v943 = vmul.f32 %v921, %v941
        %946 = vrot.lane.b32.xlu0 %v942, 127
        %v947 = vpop.permute.xlu0 %946
        %948 = vrot.lane.b32.xlu0 %v943, 127
        %v949 = vpop.permute.xlu0 %948
        %v952 = vadd.f32 %v926, %v947
        %v953 = vadd.f32 %v927, %v949
        %s954 = sld [smem:[#allocation9 + $0x34]]
        %v955 = vstv %s954
        %v956 = vmul.f32 %v920, %v955
        %v957 = vmul.f32 %v921, %v955
        %960 = vrot.lane.b32.xlu0 %v956, 127
        %v961 = vpop.permute.xlu0 %960
        %962 = vrot.lane.b32.xlu0 %v957, 127
        %v963 = vpop.permute.xlu0 %962
        %v966 = vadd.f32 %v932, %v961
        %v967 = vadd.f32 %v933, %v963
        %s968 = sld [smem:[#allocation9 + $0x58]]
        %v969 = vstv %s968
        %v970 = vmul.f32 %v920, %v969
        %v971 = vmul.f32 %v921, %v969
        %974 = vrot.lane.b32.xlu0 %v970, 127
        %v975 = vpop.permute.xlu0 %974
        %976 = vrot.lane.b32.xlu0 %v971, 127
        %v977 = vpop.permute.xlu0 %976
        %v980 = vadd.f32 %v938, %v975
        %v981 = vadd.f32 %v939, %v977
        %s982 = sld [smem:[#allocation9 + $0x11]]
        %v983 = vstv %s982
        %v984 = vmul.f32 %v920, %v983
        %v985 = vmul.f32 %v921, %v983
        %988 = vrot.lane.b32.xlu0 %v984, 126
        %v989 = vpop.permute.xlu0 %988
        %990 = vrot.lane.b32.xlu0 %v985, 126
        %v991 = vpop.permute.xlu0 %990
        %v994 = vadd.f32 %v952, %v989
        %v995 = vadd.f32 %v953, %v991
        %s996 = sld [smem:[#allocation9 + $0x35]]
        %v997 = vstv %s996
        %v998 = vmul.f32 %v920, %v997
        %v999 = vmul.f32 %v921, %v997
        %1002 = vrot.lane.b32.xlu0 %v998, 126
        %v1003 = vpop.permute.xlu0 %1002
        %1004 = vrot.lane.b32.xlu0 %v999, 126
        %v1005 = vpop.permute.xlu0 %1004
        %v1008 = vadd.f32 %v966, %v1003
        %v1009 = vadd.f32 %v967, %v1005
        %s1010 = sld [smem:[#allocation9 + $0x59]]
        %v1011 = vstv %s1010
        %v1012 = vmul.f32 %v920, %v1011
        %v1013 = vmul.f32 %v921, %v1011
        %1016 = vrot.lane.b32.xlu0 %v1012, 126
        %v1017 = vpop.permute.xlu0 %1016
        %1018 = vrot.lane.b32.xlu0 %v1013, 126
        %v1019 = vpop.permute.xlu0 %1018
        %v1022 = vadd.f32 %v980, %v1017
        %v1023 = vadd.f32 %v981, %v1019
        %s1024 = scalar_lea.vmem [#allocation2], 48
        %v1025 = vld [vmem:[%s1024] sm:$0xff]
        %v1026 = vld [vmem:[%s1024 + $0x8] sm:$0xff]
        %s1027 = sld [smem:[#allocation9 + $0x12]]
        %v1028 = vstv %s1027
        %v1029 = vmul.f32 %v1025, %v1028
        %v1030 = vmul.f32 %v1026, %v1028
        %v1031 = vadd.f32 %v994, %v1029
        %v1032 = vadd.f32 %v995, %v1030
        %s1033 = sld [smem:[#allocation9 + $0x36]]
        %v1034 = vstv %s1033
        %v1035 = vmul.f32 %v1025, %v1034
        %v1036 = vmul.f32 %v1026, %v1034
        %v1037 = vadd.f32 %v1008, %v1035
        %v1038 = vadd.f32 %v1009, %v1036
        %s1039 = sld [smem:[#allocation9 + $0x5a]]
        %v1040 = vstv %s1039
        %v1041 = vmul.f32 %v1025, %v1040
        %v1042 = vmul.f32 %v1026, %v1040
        %v1043 = vadd.f32 %v1022, %v1041
        %v1044 = vadd.f32 %v1023, %v1042
        %s1045 = sld [smem:[#allocation9 + $0x13]]
        %v1046 = vstv %s1045
        %v1047 = vmul.f32 %v1025, %v1046
        %v1048 = vmul.f32 %v1026, %v1046
        %1051 = vrot.lane.b32.xlu0 %v1047, 127
        %v1052 = vpop.permute.xlu0 %1051
        %1053 = vrot.lane.b32.xlu0 %v1048, 127
        %v1054 = vpop.permute.xlu0 %1053
        %v1057 = vadd.f32 %v1031, %v1052
        %v1058 = vadd.f32 %v1032, %v1054
        %s1059 = sld [smem:[#allocation9 + $0x37]]
        %v1060 = vstv %s1059
        %v1061 = vmul.f32 %v1025, %v1060
        %v1062 = vmul.f32 %v1026, %v1060
        %1065 = vrot.lane.b32.xlu0 %v1061, 127
        %v1066 = vpop.permute.xlu0 %1065
        %1067 = vrot.lane.b32.xlu0 %v1062, 127
        %v1068 = vpop.permute.xlu0 %1067
        %v1071 = vadd.f32 %v1037, %v1066
        %v1072 = vadd.f32 %v1038, %v1068
        %s1073 = sld [smem:[#allocation9 + $0x5b]]
        %v1074 = vstv %s1073
        %v1075 = vmul.f32 %v1025, %v1074
        %v1076 = vmul.f32 %v1026, %v1074
        %1079 = vrot.lane.b32.xlu0 %v1075, 127
        %v1080 = vpop.permute.xlu0 %1079
        %1081 = vrot.lane.b32.xlu0 %v1076, 127
        %v1082 = vpop.permute.xlu0 %1081
        %v1085 = vadd.f32 %v1043, %v1080
        %v1086 = vadd.f32 %v1044, %v1082
        %s1087 = sld [smem:[#allocation9 + $0x14]]
        %v1088 = vstv %s1087
        %v1089 = vmul.f32 %v1025, %v1088
        %v1090 = vmul.f32 %v1026, %v1088
        %1093 = vrot.lane.b32.xlu0 %v1089, 126
        %v1094 = vpop.permute.xlu0 %1093
        %1095 = vrot.lane.b32.xlu0 %v1090, 126
        %v1096 = vpop.permute.xlu0 %1095
        %v1099 = vadd.f32 %v1057, %v1094
        %v1100 = vadd.f32 %v1058, %v1096
        %s1101 = sld [smem:[#allocation9 + $0x38]]
        %v1102 = vstv %s1101
        %v1103 = vmul.f32 %v1025, %v1102
        %v1104 = vmul.f32 %v1026, %v1102
        %1107 = vrot.lane.b32.xlu0 %v1103, 126
        %v1108 = vpop.permute.xlu0 %1107
        %1109 = vrot.lane.b32.xlu0 %v1104, 126
        %v1110 = vpop.permute.xlu0 %1109
        %v1113 = vadd.f32 %v1071, %v1108
        %v1114 = vadd.f32 %v1072, %v1110
        %s1115 = sld [smem:[#allocation9 + $0x5c]]
        %v1116 = vstv %s1115
        %v1117 = vmul.f32 %v1025, %v1116
        %v1118 = vmul.f32 %v1026, %v1116
        %1121 = vrot.lane.b32.xlu0 %v1117, 126
        %v1122 = vpop.permute.xlu0 %1121
        %1123 = vrot.lane.b32.xlu0 %v1118, 126
        %v1124 = vpop.permute.xlu0 %1123
        %v1127 = vadd.f32 %v1085, %v1122
        %v1128 = vadd.f32 %v1086, %v1124
        %v1129 = vld [vmem:[%s1024 + $0x1] sm:$0xff]
        %v1130 = vld [vmem:[%s1024 + $0x9] sm:$0xff]
        %s1131 = sld [smem:[#allocation9 + $0x15]]
        %v1132 = vstv %s1131
        %v1133 = vmul.f32 %v1129, %v1132
        %v1134 = vmul.f32 %v1130, %v1132
        %v1135 = vadd.f32 %v1099, %v1133
        %v1136 = vadd.f32 %v1100, %v1134
        %s1137 = sld [smem:[#allocation9 + $0x39]]
        %v1138 = vstv %s1137
        %v1139 = vmul.f32 %v1129, %v1138
        %v1140 = vmul.f32 %v1130, %v1138
        %v1141 = vadd.f32 %v1113, %v1139
        %v1142 = vadd.f32 %v1114, %v1140
        %s1143 = sld [smem:[#allocation9 + $0x5d]]
        %v1144 = vstv %s1143
        %v1145 = vmul.f32 %v1129, %v1144
        %v1146 = vmul.f32 %v1130, %v1144
        %v1147 = vadd.f32 %v1127, %v1145
        %v1148 = vadd.f32 %v1128, %v1146
        %s1149 = sld [smem:[#allocation9 + $0x16]]
        %v1150 = vstv %s1149
        %v1151 = vmul.f32 %v1129, %v1150
        %v1152 = vmul.f32 %v1130, %v1150
        %1155 = vrot.lane.b32.xlu0 %v1151, 127
        %v1156 = vpop.permute.xlu0 %1155
        %1157 = vrot.lane.b32.xlu0 %v1152, 127
        %v1158 = vpop.permute.xlu0 %1157
        %v1161 = vadd.f32 %v1135, %v1156
        %v1162 = vadd.f32 %v1136, %v1158
        %s1163 = sld [smem:[#allocation9 + $0x3a]]
        %v1164 = vstv %s1163
        %v1165 = vmul.f32 %v1129, %v1164
        %v1166 = vmul.f32 %v1130, %v1164
        %1169 = vrot.lane.b32.xlu0 %v1165, 127
        %v1170 = vpop.permute.xlu0 %1169
        %1171 = vrot.lane.b32.xlu0 %v1166, 127
        %v1172 = vpop.permute.xlu0 %1171
        %v1175 = vadd.f32 %v1141, %v1170
        %v1176 = vadd.f32 %v1142, %v1172
        %s1177 = sld [smem:[#allocation9 + $0x5e]]
        %v1178 = vstv %s1177
        %v1179 = vmul.f32 %v1129, %v1178
        %v1180 = vmul.f32 %v1130, %v1178
        %1183 = vrot.lane.b32.xlu0 %v1179, 127
        %v1184 = vpop.permute.xlu0 %1183
        %1185 = vrot.lane.b32.xlu0 %v1180, 127
        %v1186 = vpop.permute.xlu0 %1185
        %v1189 = vadd.f32 %v1147, %v1184
        %v1190 = vadd.f32 %v1148, %v1186
        %s1191 = sld [smem:[#allocation9 + $0x17]]
        %v1192 = vstv %s1191
        %v1193 = vmul.f32 %v1129, %v1192
        %v1194 = vmul.f32 %v1130, %v1192
        %1197 = vrot.lane.b32.xlu0 %v1193, 126
        %v1198 = vpop.permute.xlu0 %1197
        %1199 = vrot.lane.b32.xlu0 %v1194, 126
        %v1200 = vpop.permute.xlu0 %1199
        %v1203 = vadd.f32 %v1161, %v1198
        %v1204 = vadd.f32 %v1162, %v1200
        %s1205 = sld [smem:[#allocation9 + $0x3b]]
        %v1206 = vstv %s1205
        %v1207 = vmul.f32 %v1129, %v1206
        %v1208 = vmul.f32 %v1130, %v1206
        %1211 = vrot.lane.b32.xlu0 %v1207, 126
        %v1212 = vpop.permute.xlu0 %1211
        %1213 = vrot.lane.b32.xlu0 %v1208, 126
        %v1214 = vpop.permute.xlu0 %1213
        %v1217 = vadd.f32 %v1175, %v1212
        %v1218 = vadd.f32 %v1176, %v1214
        %s1219 = sld [smem:[#allocation9 + $0x5f]]
        %v1220 = vstv %s1219
        %v1221 = vmul.f32 %v1129, %v1220
        %v1222 = vmul.f32 %v1130, %v1220
        %1225 = vrot.lane.b32.xlu0 %v1221, 126
        %v1226 = vpop.permute.xlu0 %1225
        %1227 = vrot.lane.b32.xlu0 %v1222, 126
        %v1228 = vpop.permute.xlu0 %1227
        %v1231 = vadd.f32 %v1189, %v1226
        %v1232 = vadd.f32 %v1190, %v1228
        %v1233 = vld [vmem:[%s1024 + $0x2] sm:$0xff]
        %v1234 = vld [vmem:[%s1024 + $0xa] sm:$0xff]
        %s1235 = sld [smem:[#allocation9 + $0x18]]
        %v1236 = vstv %s1235
        %v1237 = vmul.f32 %v1233, %v1236
        %v1238 = vmul.f32 %v1234, %v1236
        %v1239 = vadd.f32 %v1203, %v1237
        %v1240 = vadd.f32 %v1204, %v1238
        %s1241 = sld [smem:[#allocation9 + $0x3c]]
        %v1242 = vstv %s1241
        %v1243 = vmul.f32 %v1233, %v1242
        %v1244 = vmul.f32 %v1234, %v1242
        %v1245 = vadd.f32 %v1217, %v1243
        %v1246 = vadd.f32 %v1218, %v1244
        %s1247 = sld [smem:[#allocation9 + $0x60]]
        %v1248 = vstv %s1247
        %v1249 = vmul.f32 %v1233, %v1248
        %v1250 = vmul.f32 %v1234, %v1248
        %v1251 = vadd.f32 %v1231, %v1249
        %v1252 = vadd.f32 %v1232, %v1250
        %s1253 = sld [smem:[#allocation9 + $0x19]]
        %v1254 = vstv %s1253
        %v1255 = vmul.f32 %v1233, %v1254
        %v1256 = vmul.f32 %v1234, %v1254
        %1259 = vrot.lane.b32.xlu0 %v1255, 127
        %v1260 = vpop.permute.xlu0 %1259
        %1261 = vrot.lane.b32.xlu0 %v1256, 127
        %v1262 = vpop.permute.xlu0 %1261
        %v1265 = vadd.f32 %v1239, %v1260
        %v1266 = vadd.f32 %v1240, %v1262
        %s1267 = sld [smem:[#allocation9 + $0x3d]]
        %v1268 = vstv %s1267
        %v1269 = vmul.f32 %v1233, %v1268
        %v1270 = vmul.f32 %v1234, %v1268
        %1273 = vrot.lane.b32.xlu0 %v1269, 127
        %v1274 = vpop.permute.xlu0 %1273
        %1275 = vrot.lane.b32.xlu0 %v1270, 127
        %v1276 = vpop.permute.xlu0 %1275
        %v1279 = vadd.f32 %v1245, %v1274
        %v1280 = vadd.f32 %v1246, %v1276
        %s1281 = sld [smem:[#allocation9 + $0x61]]
        %v1282 = vstv %s1281
        %v1283 = vmul.f32 %v1233, %v1282
        %v1284 = vmul.f32 %v1234, %v1282
        %1287 = vrot.lane.b32.xlu0 %v1283, 127
        %v1288 = vpop.permute.xlu0 %1287
        %1289 = vrot.lane.b32.xlu0 %v1284, 127
        %v1290 = vpop.permute.xlu0 %1289
        %v1293 = vadd.f32 %v1251, %v1288
        %v1294 = vadd.f32 %v1252, %v1290
        %s1295 = sld [smem:[#allocation9 + $0x1a]]
        %v1296 = vstv %s1295
        %v1297 = vmul.f32 %v1233, %v1296
        %v1298 = vmul.f32 %v1234, %v1296
        %1301 = vrot.lane.b32.xlu0 %v1297, 126
        %v1302 = vpop.permute.xlu0 %1301
        %1303 = vrot.lane.b32.xlu0 %v1298, 126
        %v1304 = vpop.permute.xlu0 %1303
        %v1307 = vadd.f32 %v1265, %v1302
        %v1308 = vadd.f32 %v1266, %v1304
        %s1309 = sld [smem:[#allocation9 + $0x3e]]
        %v1310 = vstv %s1309
        %v1311 = vmul.f32 %v1233, %v1310
        %v1312 = vmul.f32 %v1234, %v1310
        %1315 = vrot.lane.b32.xlu0 %v1311, 126
        %v1316 = vpop.permute.xlu0 %1315
        %1317 = vrot.lane.b32.xlu0 %v1312, 126
        %v1318 = vpop.permute.xlu0 %1317
        %v1321 = vadd.f32 %v1279, %v1316
        %v1322 = vadd.f32 %v1280, %v1318
        %s1323 = sld [smem:[#allocation9 + $0x62]]
        %v1324 = vstv %s1323
        %v1325 = vmul.f32 %v1233, %v1324
        %v1326 = vmul.f32 %v1234, %v1324
        %1329 = vrot.lane.b32.xlu0 %v1325, 126
        %v1330 = vpop.permute.xlu0 %1329
        %1331 = vrot.lane.b32.xlu0 %v1326, 126
        %v1332 = vpop.permute.xlu0 %1331
        %v1335 = vadd.f32 %v1293, %v1330
        %v1336 = vadd.f32 %v1294, %v1332
        %s1337 = scalar_lea.vmem [#allocation2], 72
        %v1338 = vld [vmem:[%s1337] sm:$0xff]
        %v1339 = vld [vmem:[%s1337 + $0x8] sm:$0xff]
        %s1340 = sld [smem:[#allocation9 + $0x1b]]
        %v1341 = vstv %s1340
        %v1342 = vmul.f32 %v1338, %v1341
        %v1343 = vmul.f32 %v1339, %v1341
        %v1344 = vadd.f32 %v1307, %v1342
        %v1345 = vadd.f32 %v1308, %v1343
        %s1346 = sld [smem:[#allocation9 + $0x3f]]
        %v1347 = vstv %s1346
        %v1348 = vmul.f32 %v1338, %v1347
        %v1349 = vmul.f32 %v1339, %v1347
        %v1350 = vadd.f32 %v1321, %v1348
        %v1351 = vadd.f32 %v1322, %v1349
        %s1352 = sld [smem:[#allocation9 + $0x63]]
        %v1353 = vstv %s1352
        %v1354 = vmul.f32 %v1338, %v1353
        %v1355 = vmul.f32 %v1339, %v1353
        %v1356 = vadd.f32 %v1335, %v1354
        %v1357 = vadd.f32 %v1336, %v1355
        %s1358 = sld [smem:[#allocation9 + $0x1c]]
        %v1359 = vstv %s1358
        %v1360 = vmul.f32 %v1338, %v1359
        %v1361 = vmul.f32 %v1339, %v1359
        %1364 = vrot.lane.b32.xlu0 %v1360, 127
        %v1365 = vpop.permute.xlu0 %1364
        %1366 = vrot.lane.b32.xlu0 %v1361, 127
        %v1367 = vpop.permute.xlu0 %1366
        %v1370 = vadd.f32 %v1344, %v1365
        %v1371 = vadd.f32 %v1345, %v1367
        %s1372 = sld [smem:[#allocation9 + $0x40]]
        %v1373 = vstv %s1372
        %v1374 = vmul.f32 %v1338, %v1373
        %v1375 = vmul.f32 %v1339, %v1373
        %1378 = vrot.lane.b32.xlu0 %v1374, 127
        %v1379 = vpop.permute.xlu0 %1378
        %1380 = vrot.lane.b32.xlu0 %v1375, 127
        %v1381 = vpop.permute.xlu0 %1380
        %v1384 = vadd.f32 %v1350, %v1379
        %v1385 = vadd.f32 %v1351, %v1381
        %s1386 = sld [smem:[#allocation9 + $0x64]]
        %v1387 = vstv %s1386
        %v1388 = vmul.f32 %v1338, %v1387
        %v1389 = vmul.f32 %v1339, %v1387
        %1392 = vrot.lane.b32.xlu0 %v1388, 127
        %v1393 = vpop.permute.xlu0 %1392
        %1394 = vrot.lane.b32.xlu0 %v1389, 127
        %v1395 = vpop.permute.xlu0 %1394
        %v1398 = vadd.f32 %v1356, %v1393
        %v1399 = vadd.f32 %v1357, %v1395
        %s1400 = sld [smem:[#allocation9 + $0x1d]]
        %v1401 = vstv %s1400
        %v1402 = vmul.f32 %v1338, %v1401
        %v1403 = vmul.f32 %v1339, %v1401
        %1406 = vrot.lane.b32.xlu0 %v1402, 126
        %v1407 = vpop.permute.xlu0 %1406
        %1408 = vrot.lane.b32.xlu0 %v1403, 126
        %v1409 = vpop.permute.xlu0 %1408
        %v1412 = vadd.f32 %v1370, %v1407
        %v1413 = vadd.f32 %v1371, %v1409
        %s1414 = sld [smem:[#allocation9 + $0x41]]
        %v1415 = vstv %s1414
        %v1416 = vmul.f32 %v1338, %v1415
        %v1417 = vmul.f32 %v1339, %v1415
        %1420 = vrot.lane.b32.xlu0 %v1416, 126
        %v1421 = vpop.permute.xlu0 %1420
        %1422 = vrot.lane.b32.xlu0 %v1417, 126
        %v1423 = vpop.permute.xlu0 %1422
        %v1426 = vadd.f32 %v1384, %v1421
        %v1427 = vadd.f32 %v1385, %v1423
        %s1428 = sld [smem:[#allocation9 + $0x65]]
        %v1429 = vstv %s1428
        %v1430 = vmul.f32 %v1338, %v1429
        %v1431 = vmul.f32 %v1339, %v1429
        %1434 = vrot.lane.b32.xlu0 %v1430, 126
        %v1435 = vpop.permute.xlu0 %1434
        %1436 = vrot.lane.b32.xlu0 %v1431, 126
        %v1437 = vpop.permute.xlu0 %1436
        %v1440 = vadd.f32 %v1398, %v1435
        %v1441 = vadd.f32 %v1399, %v1437
        %v1442 = vld [vmem:[%s1337 + $0x1] sm:$0xff]
        %v1443 = vld [vmem:[%s1337 + $0x9] sm:$0xff]
        %s1444 = sld [smem:[#allocation9 + $0x1e]]
        %v1445 = vstv %s1444
        %v1446 = vmul.f32 %v1442, %v1445
        %v1447 = vmul.f32 %v1443, %v1445
        %v1448 = vadd.f32 %v1412, %v1446
        %v1449 = vadd.f32 %v1413, %v1447
        %s1450 = sld [smem:[#allocation9 + $0x42]]
        %v1451 = vstv %s1450
        %v1452 = vmul.f32 %v1442, %v1451
        %v1453 = vmul.f32 %v1443, %v1451
        %v1454 = vadd.f32 %v1426, %v1452
        %v1455 = vadd.f32 %v1427, %v1453
        %s1456 = sld [smem:[#allocation9 + $0x66]]
        %v1457 = vstv %s1456
        %v1458 = vmul.f32 %v1442, %v1457
        %v1459 = vmul.f32 %v1443, %v1457
        %v1460 = vadd.f32 %v1440, %v1458
        %v1461 = vadd.f32 %v1441, %v1459
        %s1462 = sld [smem:[#allocation9 + $0x1f]]
        %v1463 = vstv %s1462
        %v1464 = vmul.f32 %v1442, %v1463
        %v1465 = vmul.f32 %v1443, %v1463
        %1468 = vrot.lane.b32.xlu0 %v1464, 127
        %v1469 = vpop.permute.xlu0 %1468
        %1470 = vrot.lane.b32.xlu0 %v1465, 127
        %v1471 = vpop.permute.xlu0 %1470
        %v1474 = vadd.f32 %v1448, %v1469
        %v1475 = vadd.f32 %v1449, %v1471
        %s1476 = sld [smem:[#allocation9 + $0x43]]
        %v1477 = vstv %s1476
        %v1478 = vmul.f32 %v1442, %v1477
        %v1479 = vmul.f32 %v1443, %v1477
        %1482 = vrot.lane.b32.xlu0 %v1478, 127
        %v1483 = vpop.permute.xlu0 %1482
        %1484 = vrot.lane.b32.xlu0 %v1479, 127
        %v1485 = vpop.permute.xlu0 %1484
        %v1488 = vadd.f32 %v1454, %v1483
        %v1489 = vadd.f32 %v1455, %v1485
        %s1490 = sld [smem:[#allocation9 + $0x67]]
        %v1491 = vstv %s1490
        %v1492 = vmul.f32 %v1442, %v1491
        %v1493 = vmul.f32 %v1443, %v1491
        %1496 = vrot.lane.b32.xlu0 %v1492, 127
        %v1497 = vpop.permute.xlu0 %1496
        %1498 = vrot.lane.b32.xlu0 %v1493, 127
        %v1499 = vpop.permute.xlu0 %1498
        %v1502 = vadd.f32 %v1460, %v1497
        %v1503 = vadd.f32 %v1461, %v1499
        %s1504 = sld [smem:[#allocation9 + $0x20]]
        %v1505 = vstv %s1504
        %v1506 = vmul.f32 %v1442, %v1505
        %v1507 = vmul.f32 %v1443, %v1505
        %1510 = vrot.lane.b32.xlu0 %v1506, 126
        %v1511 = vpop.permute.xlu0 %1510
        %1512 = vrot.lane.b32.xlu0 %v1507, 126
        %v1513 = vpop.permute.xlu0 %1512
        %v1516 = vadd.f32 %v1474, %v1511
        %v1517 = vadd.f32 %v1475, %v1513
        %s1518 = sld [smem:[#allocation9 + $0x44]]
        %v1519 = vstv %s1518
        %v1520 = vmul.f32 %v1442, %v1519
        %v1521 = vmul.f32 %v1443, %v1519
        %1524 = vrot.lane.b32.xlu0 %v1520, 126
        %v1525 = vpop.permute.xlu0 %1524
        %1526 = vrot.lane.b32.xlu0 %v1521, 126
        %v1527 = vpop.permute.xlu0 %1526
        %v1530 = vadd.f32 %v1488, %v1525
        %v1531 = vadd.f32 %v1489, %v1527
        %s1532 = sld [smem:[#allocation9 + $0x68]]
        %v1533 = vstv %s1532
        %v1534 = vmul.f32 %v1442, %v1533
        %v1535 = vmul.f32 %v1443, %v1533
        %1538 = vrot.lane.b32.xlu0 %v1534, 126
        %v1539 = vpop.permute.xlu0 %1538
        %1540 = vrot.lane.b32.xlu0 %v1535, 126
        %v1541 = vpop.permute.xlu0 %1540
        %v1544 = vadd.f32 %v1502, %v1539
        %v1545 = vadd.f32 %v1503, %v1541
        %v1546 = vld [vmem:[%s1337 + $0x2] sm:$0xff]
        %v1547 = vld [vmem:[%s1337 + $0xa] sm:$0xff]
        %s1548 = sld [smem:[#allocation9 + $0x21]]
        %v1549 = vstv %s1548
        %v1550 = vmul.f32 %v1546, %v1549
        %v1551 = vmul.f32 %v1547, %v1549
        %v1552 = vadd.f32 %v1516, %v1550
        %v1553 = vadd.f32 %v1517, %v1551
        %s1554 = sld [smem:[#allocation9 + $0x45]]
        %v1555 = vstv %s1554
        %v1556 = vmul.f32 %v1546, %v1555
        %v1557 = vmul.f32 %v1547, %v1555
        %v1558 = vadd.f32 %v1530, %v1556
        %v1559 = vadd.f32 %v1531, %v1557
        %s1560 = sld [smem:[#allocation9 + $0x69]]
        %v1561 = vstv %s1560
        %v1562 = vmul.f32 %v1546, %v1561
        %v1563 = vmul.f32 %v1547, %v1561
        %v1564 = vadd.f32 %v1544, %v1562
        %v1565 = vadd.f32 %v1545, %v1563
        %s1566 = sld [smem:[#allocation9 + $0x22]]
        %v1567 = vstv %s1566
        %v1568 = vmul.f32 %v1546, %v1567
        %v1569 = vmul.f32 %v1547, %v1567
        %1572 = vrot.lane.b32.xlu0 %v1568, 127
        %v1573 = vpop.permute.xlu0 %1572
        %1574 = vrot.lane.b32.xlu0 %v1569, 127
        %v1575 = vpop.permute.xlu0 %1574
        %v1578 = vadd.f32 %v1552, %v1573
        %v1579 = vadd.f32 %v1553, %v1575
        %s1580 = sld [smem:[#allocation9 + $0x46]]
        %v1581 = vstv %s1580
        %v1582 = vmul.f32 %v1546, %v1581
        %v1583 = vmul.f32 %v1547, %v1581
        %1586 = vrot.lane.b32.xlu0 %v1582, 127
        %v1587 = vpop.permute.xlu0 %1586
        %1588 = vrot.lane.b32.xlu0 %v1583, 127
        %v1589 = vpop.permute.xlu0 %1588
        %v1592 = vadd.f32 %v1558, %v1587
        %v1593 = vadd.f32 %v1559, %v1589
        %s1594 = sld [smem:[#allocation9 + $0x6a]]
        %v1595 = vstv %s1594
        %v1596 = vmul.f32 %v1546, %v1595
        %v1597 = vmul.f32 %v1547, %v1595
        %1600 = vrot.lane.b32.xlu0 %v1596, 127
        %v1601 = vpop.permute.xlu0 %1600
        %1602 = vrot.lane.b32.xlu0 %v1597, 127
        %v1603 = vpop.permute.xlu0 %1602
        %v1606 = vadd.f32 %v1564, %v1601
        %v1607 = vadd.f32 %v1565, %v1603
        %s1608 = sld [smem:[#allocation9 + $0x23]]
        %v1609 = vstv %s1608
        %v1610 = vmul.f32 %v1546, %v1609
        %v1611 = vmul.f32 %v1547, %v1609
        %1614 = vrot.lane.b32.xlu0 %v1610, 126
        %v1615 = vpop.permute.xlu0 %1614
        %1616 = vrot.lane.b32.xlu0 %v1611, 126
        %v1617 = vpop.permute.xlu0 %1616
        %v1620 = vadd.f32 %v1578, %v1615
        %v1621 = vadd.f32 %v1579, %v1617
        %s1622 = sld [smem:[#allocation9 + $0x47]]
        %v1623 = vstv %s1622
        %v1624 = vmul.f32 %v1546, %v1623
        %v1625 = vmul.f32 %v1547, %v1623
        %1628 = vrot.lane.b32.xlu0 %v1624, 126
        %v1629 = vpop.permute.xlu0 %1628
        %1630 = vrot.lane.b32.xlu0 %v1625, 126
        %v1631 = vpop.permute.xlu0 %1630
        %v1634 = vadd.f32 %v1592, %v1629
        %v1635 = vadd.f32 %v1593, %v1631
        %s1636 = sld [smem:[#allocation9 + $0x6b]]
        %v1637 = vstv %s1636
        %v1638 = vmul.f32 %v1546, %v1637
        %v1639 = vmul.f32 %v1547, %v1637
        %1642 = vrot.lane.b32.xlu0 %v1638, 126
        %v1643 = vpop.permute.xlu0 %1642
        %1644 = vrot.lane.b32.xlu0 %v1639, 126
        %v1645 = vpop.permute.xlu0 %1644
        %v1648 = vadd.f32 %v1606, %v1643
        %v1649 = vadd.f32 %v1607, %v1645
        %1652 = vrot.lane.b32.xlu0 %v1620, 1
        %v1653 = vpop.permute.xlu0 %1652
        %1654 = vrot.lane.b32.xlu0 %v1621, 1
        %v1655 = vpop.permute.xlu0 %1654
        %1658 = vst.msk [vmem:[#allocation3 + $0x1] sm:$0xff] %vm384, %v1653
        %1659 = vst.msk [vmem:[#allocation3 + $0x9] sm:$0xff] %vm384, %v1655
        %1662 = vrot.lane.b32.xlu0 %v1634, 1
        %v1663 = vpop.permute.xlu0 %1662
        %1664 = vrot.lane.b32.xlu0 %v1635, 1
        %v1665 = vpop.permute.xlu0 %1664
        %s1668 = scalar_lea.vmem [#allocation3], 24
        %1669 = vst.msk [vmem:[%s1668 + $0x1] sm:$0xff] %vm384, %v1663
        %1670 = vst.msk [vmem:[%s1668 + $0x9] sm:$0xff] %vm384, %v1665
        %1673 = vrot.lane.b32.xlu0 %v1648, 1
        %v1674 = vpop.permute.xlu0 %1673
        %1675 = vrot.lane.b32.xlu0 %v1649, 1
        %v1676 = vpop.permute.xlu0 %1675
        %s1679 = scalar_lea.vmem [#allocation3], 48
        %1680 = vst.msk [vmem:[%s1679 + $0x1] sm:$0xff] %vm384, %v1674
        %1681 = vst.msk [vmem:[%s1679 + $0x9] sm:$0xff] %vm384, %v1676
        %s1682 = sld [smem:[#allocation4]]
        %v1683 = vstv %s1682
        %s1684 = sld [smem:[#allocation12]]
        %v1685 = vld [vmem:[#allocation3] sm:$0xff]
        %v1686 = vld [vmem:[#allocation3 + $0x8] sm:$0xff]
        %v1687 = vstv %s1684
        %v1688 = vmul.f32 %v1685, %v1687
        %v1689 = vmul.f32 %v1686, %v1687
        %v1690 = vadd.f32 %v1683, %v1688
        %v1691 = vadd.f32 %v1683, %v1689
        %s1692 = sld [smem:[#allocation12 + $0x1]]
        %v1693 = vstv %s1692
        %v1694 = vmul.f32 %v1685, %v1693
        %v1695 = vmul.f32 %v1686, %v1693
        %1698 = vrot.lane.b32.xlu0 %v1694, 127
        %v1699 = vpop.permute.xlu0 %1698
        %1700 = vrot.lane.b32.xlu0 %v1695, 127
        %v1701 = vpop.permute.xlu0 %1700
        %v1704 = vadd.f32 %v1690, %v1699
        %v1705 = vadd.f32 %v1691, %v1701
        %s1706 = sld [smem:[#allocation12 + $0x2]]
        %v1707 = vstv %s1706
        %v1708 = vmul.f32 %v1685, %v1707
        %v1709 = vmul.f32 %v1686, %v1707
        %1712 = vrot.lane.b32.xlu0 %v1708, 126
        %v1713 = vpop.permute.xlu0 %1712
        %1714 = vrot.lane.b32.xlu0 %v1709, 126
        %v1715 = vpop.permute.xlu0 %1714
        %v1718 = vadd.f32 %v1704, %v1713
        %v1719 = vadd.f32 %v1705, %v1715
        %s1720 = sld [smem:[#allocation12 + $0x3]]
        %v1721 = vld [vmem:[#allocation3 + $0x1] sm:$0xff]
        %v1722 = vld [vmem:[#allocation3 + $0x9] sm:$0xff]
        %v1723 = vstv %s1720
        %v1724 = vmul.f32 %v1721, %v1723
        %v1725 = vmul.f32 %v1722, %v1723
        %v1726 = vadd.f32 %v1718, %v1724
        %v1727 = vadd.f32 %v1719, %v1725
        %s1728 = sld [smem:[#allocation12 + $0x4]]
        %v1729 = vstv %s1728
        %v1730 = vmul.f32 %v1721, %v1729
        %v1731 = vmul.f32 %v1722, %v1729
        %1734 = vrot.lane.b32.xlu0 %v1730, 127
        %v1735 = vpop.permute.xlu0 %1734
        %1736 = vrot.lane.b32.xlu0 %v1731, 127
        %v1737 = vpop.permute.xlu0 %1736
        %v1740 = vadd.f32 %v1726, %v1735
        %v1741 = vadd.f32 %v1727, %v1737
        %s1742 = sld [smem:[#allocation12 + $0x5]]
        %v1743 = vstv %s1742
        %v1744 = vmul.f32 %v1721, %v1743
        %v1745 = vmul.f32 %v1722, %v1743
        %1748 = vrot.lane.b32.xlu0 %v1744, 126
        %v1749 = vpop.permute.xlu0 %1748
        %1750 = vrot.lane.b32.xlu0 %v1745, 126
        %v1751 = vpop.permute.xlu0 %1750
        %v1754 = vadd.f32 %v1740, %v1749
        %v1755 = vadd.f32 %v1741, %v1751
        %s1756 = sld [smem:[#allocation12 + $0x6]]
        %v1757 = vld [vmem:[#allocation3 + $0x2] sm:$0xff]
        %v1758 = vld [vmem:[#allocation3 + $0xa] sm:$0xff]
        %v1759 = vstv %s1756
        %v1760 = vmul.f32 %v1757, %v1759
        %v1761 = vmul.f32 %v1758, %v1759
        %v1762 = vadd.f32 %v1754, %v1760
        %v1763 = vadd.f32 %v1755, %v1761
        %s1764 = sld [smem:[#allocation12 + $0x7]]
        %v1765 = vstv %s1764
        %v1766 = vmul.f32 %v1757, %v1765
        %v1767 = vmul.f32 %v1758, %v1765
        %1770 = vrot.lane.b32.xlu0 %v1766, 127
        %v1771 = vpop.permute.xlu0 %1770
        %1772 = vrot.lane.b32.xlu0 %v1767, 127
        %v1773 = vpop.permute.xlu0 %1772
        %v1776 = vadd.f32 %v1762, %v1771
        %v1777 = vadd.f32 %v1763, %v1773
        %s1778 = sld [smem:[#allocation12 + $0x8]]
        %v1779 = vstv %s1778
        %v1780 = vmul.f32 %v1757, %v1779
        %v1781 = vmul.f32 %v1758, %v1779
        %1784 = vrot.lane.b32.xlu0 %v1780, 126
        %v1785 = vpop.permute.xlu0 %1784
        %1786 = vrot.lane.b32.xlu0 %v1781, 126
        %v1787 = vpop.permute.xlu0 %1786
        %v1790 = vadd.f32 %v1776, %v1785
        %v1791 = vadd.f32 %v1777, %v1787
        %s1792 = sld [smem:[#allocation12 + $0x9]]
        %v1793 = vld [vmem:[%s1668] sm:$0xff]
        %v1794 = vld [vmem:[%s1668 + $0x8] sm:$0xff]
        %v1795 = vstv %s1792
        %v1796 = vmul.f32 %v1793, %v1795
        %v1797 = vmul.f32 %v1794, %v1795
        %v1798 = vadd.f32 %v1790, %v1796
        %v1799 = vadd.f32 %v1791, %v1797
        %s1800 = sld [smem:[#allocation12 + $0xa]]
        %v1801 = vstv %s1800
        %v1802 = vmul.f32 %v1793, %v1801
        %v1803 = vmul.f32 %v1794, %v1801
        %1806 = vrot.lane.b32.xlu0 %v1802, 127
        %v1807 = vpop.permute.xlu0 %1806
        %1808 = vrot.lane.b32.xlu0 %v1803, 127
        %v1809 = vpop.permute.xlu0 %1808
        %v1812 = vadd.f32 %v1798, %v1807
        %v1813 = vadd.f32 %v1799, %v1809
        %s1814 = sld [smem:[#allocation12 + $0xb]]
        %v1815 = vstv %s1814
        %v1816 = vmul.f32 %v1793, %v1815
        %v1817 = vmul.f32 %v1794, %v1815
        %1820 = vrot.lane.b32.xlu0 %v1816, 126
        %v1821 = vpop.permute.xlu0 %1820
        %1822 = vrot.lane.b32.xlu0 %v1817, 126
        %v1823 = vpop.permute.xlu0 %1822
        %v1826 = vadd.f32 %v1812, %v1821
        %v1827 = vadd.f32 %v1813, %v1823
        %s1828 = sld [smem:[#allocation12 + $0xc]]
        %v1829 = vld [vmem:[%s1668 + $0x1] sm:$0xff]
        %v1830 = vld [vmem:[%s1668 + $0x9] sm:$0xff]
        %v1831 = vstv %s1828
        %v1832 = vmul.f32 %v1829, %v1831
        %v1833 = vmul.f32 %v1830, %v1831
        %v1834 = vadd.f32 %v1826, %v1832
        %v1835 = vadd.f32 %v1827, %v1833
        %s1836 = sld [smem:[#allocation12 + $0xd]]
        %v1837 = vstv %s1836
        %v1838 = vmul.f32 %v1829, %v1837
        %v1839 = vmul.f32 %v1830, %v1837
        %1842 = vrot.lane.b32.xlu0 %v1838, 127
        %v1843 = vpop.permute.xlu0 %1842
        %1844 = vrot.lane.b32.xlu0 %v1839, 127
        %v1845 = vpop.permute.xlu0 %1844
        %v1848 = vadd.f32 %v1834, %v1843
        %v1849 = vadd.f32 %v1835, %v1845
        %s1850 = sld [smem:[#allocation12 + $0xe]]
        %v1851 = vstv %s1850
        %v1852 = vmul.f32 %v1829, %v1851
        %v1853 = vmul.f32 %v1830, %v1851
        %1856 = vrot.lane.b32.xlu0 %v1852, 126
        %v1857 = vpop.permute.xlu0 %1856
        %1858 = vrot.lane.b32.xlu0 %v1853, 126
        %v1859 = vpop.permute.xlu0 %1858
        %v1862 = vadd.f32 %v1848, %v1857
        %v1863 = vadd.f32 %v1849, %v1859
        %s1864 = sld [smem:[#allocation12 + $0xf]]
        %v1865 = vld [vmem:[%s1668 + $0x2] sm:$0xff]
        %v1866 = vld [vmem:[%s1668 + $0xa] sm:$0xff]
        %v1867 = vstv %s1864
        %v1868 = vmul.f32 %v1865, %v1867
        %v1869 = vmul.f32 %v1866, %v1867
        %v1870 = vadd.f32 %v1862, %v1868
        %v1871 = vadd.f32 %v1863, %v1869
        %s1872 = sld [smem:[#allocation12 + $0x10]]
        %v1873 = vstv %s1872
        %v1874 = vmul.f32 %v1865, %v1873
        %v1875 = vmul.f32 %v1866, %v1873
        %1878 = vrot.lane.b32.xlu0 %v1874, 127
        %v1879 = vpop.permute.xlu0 %1878
        %1880 = vrot.lane.b32.xlu0 %v1875, 127
        %v1881 = vpop.permute.xlu0 %1880
        %v1884 = vadd.f32 %v1870, %v1879
        %v1885 = vadd.f32 %v1871, %v1881
        %s1886 = sld [smem:[#allocation12 + $0x11]]
        %v1887 = vstv %s1886
        %v1888 = vmul.f32 %v1865, %v1887
        %v1889 = vmul.f32 %v1866, %v1887
        %1892 = vrot.lane.b32.xlu0 %v1888, 126
        %v1893 = vpop.permute.xlu0 %1892
        %1894 = vrot.lane.b32.xlu0 %v1889, 126
        %v1895 = vpop.permute.xlu0 %1894
        %v1898 = vadd.f32 %v1884, %v1893
        %v1899 = vadd.f32 %v1885, %v1895
        %s1900 = sld [smem:[#allocation12 + $0x12]]
        %v1901 = vld [vmem:[%s1679] sm:$0xff]
        %v1902 = vld [vmem:[%s1679 + $0x8] sm:$0xff]
        %v1903 = vstv %s1900
        %v1904 = vmul.f32 %v1901, %v1903
        %v1905 = vmul.f32 %v1902, %v1903
        %v1906 = vadd.f32 %v1898, %v1904
        %v1907 = vadd.f32 %v1899, %v1905
        %s1908 = sld [smem:[#allocation12 + $0x13]]
        %v1909 = vstv %s1908
        %v1910 = vmul.f32 %v1901, %v1909
        %v1911 = vmul.f32 %v1902, %v1909
        %1914 = vrot.lane.b32.xlu0 %v1910, 127
        %v1915 = vpop.permute.xlu0 %1914
        %1916 = vrot.lane.b32.xlu0 %v1911, 127
        %v1917 = vpop.permute.xlu0 %1916
        %v1920 = vadd.f32 %v1906, %v1915
        %v1921 = vadd.f32 %v1907, %v1917
        %s1922 = sld [smem:[#allocation12 + $0x14]]
        %v1923 = vstv %s1922
        %v1924 = vmul.f32 %v1901, %v1923
        %v1925 = vmul.f32 %v1902, %v1923
        %1928 = vrot.lane.b32.xlu0 %v1924, 126
        %v1929 = vpop.permute.xlu0 %1928
        %1930 = vrot.lane.b32.xlu0 %v1925, 126
        %v1931 = vpop.permute.xlu0 %1930
        %v1934 = vadd.f32 %v1920, %v1929
        %v1935 = vadd.f32 %v1921, %v1931
        %s1936 = sld [smem:[#allocation12 + $0x15]]
        %v1937 = vld [vmem:[%s1679 + $0x1] sm:$0xff]
        %v1938 = vld [vmem:[%s1679 + $0x9] sm:$0xff]
        %v1939 = vstv %s1936
        %v1940 = vmul.f32 %v1937, %v1939
        %v1941 = vmul.f32 %v1938, %v1939
        %v1942 = vadd.f32 %v1934, %v1940
        %v1943 = vadd.f32 %v1935, %v1941
        %s1944 = sld [smem:[#allocation12 + $0x16]]
        %v1945 = vstv %s1944
        %v1946 = vmul.f32 %v1937, %v1945
        %v1947 = vmul.f32 %v1938, %v1945
        %1950 = vrot.lane.b32.xlu0 %v1946, 127
        %v1951 = vpop.permute.xlu0 %1950
        %1952 = vrot.lane.b32.xlu0 %v1947, 127
        %v1953 = vpop.permute.xlu0 %1952
        %v1956 = vadd.f32 %v1942, %v1951
        %v1957 = vadd.f32 %v1943, %v1953
        %s1958 = sld [smem:[#allocation12 + $0x17]]
        %v1959 = vstv %s1958
        %v1960 = vmul.f32 %v1937, %v1959
        %v1961 = vmul.f32 %v1938, %v1959
        %1964 = vrot.lane.b32.xlu0 %v1960, 126
        %v1965 = vpop.permute.xlu0 %1964
        %1966 = vrot.lane.b32.xlu0 %v1961, 126
        %v1967 = vpop.permute.xlu0 %1966
        %v1970 = vadd.f32 %v1956, %v1965
        %v1971 = vadd.f32 %v1957, %v1967
        %s1972 = sld [smem:[#allocation12 + $0x18]]
        %v1973 = vld [vmem:[%s1679 + $0x2] sm:$0xff]
        %v1974 = vld [vmem:[%s1679 + $0xa] sm:$0xff]
        %v1975 = vstv %s1972
        %v1976 = vmul.f32 %v1973, %v1975
        %v1977 = vmul.f32 %v1974, %v1975
        %v1978 = vadd.f32 %v1970, %v1976
        %v1979 = vadd.f32 %v1971, %v1977
        %s1980 = sld [smem:[#allocation12 + $0x19]]
        %v1981 = vstv %s1980
        %v1982 = vmul.f32 %v1973, %v1981
        %v1983 = vmul.f32 %v1974, %v1981
        %1986 = vrot.lane.b32.xlu0 %v1982, 127
        %v1987 = vpop.permute.xlu0 %1986
        %1988 = vrot.lane.b32.xlu0 %v1983, 127
        %v1989 = vpop.permute.xlu0 %1988
        %v1992 = vadd.f32 %v1978, %v1987
        %v1993 = vadd.f32 %v1979, %v1989
        %s1994 = sld [smem:[#allocation12 + $0x1a]]
        %v1995 = vstv %s1994
        %v1996 = vmul.f32 %v1973, %v1995
        %v1997 = vmul.f32 %v1974, %v1995
        %2000 = vrot.lane.b32.xlu0 %v1996, 126
        %v2001 = vpop.permute.xlu0 %2000
        %2002 = vrot.lane.b32.xlu0 %v1997, 126
        %v2003 = vpop.permute.xlu0 %2002
        %v2006 = vadd.f32 %v1992, %v2001
        %v2007 = vadd.f32 %v1993, %v2003
        %vm2008 = vcmask 130048
        %2009 = vst.msk [vmem:[%s282] sm:$0xff] %vm2008, %v2006
        %2010 = vst.msk [vmem:[%s282 + $0x8] sm:$0xff] %vm2008, %v2007
        %s2011 = sand.u32 %s143, 1
        %s2012 = scalar_lea.sflag [#allocation7], %s2011
        %s2013 = sand.u32 %s143, 1
        %s2014 = smul.addr %s2013, 16
        %s2015 = scalar_lea.vmem [#allocation13], %s2014
        // Predicated region
        $region57: #{tpu_custom_call.1} parent=39 // pred_check
          %p2016 = pneg %p153
        $region58: #{tpu_custom_call.1} parent=39 // pred_check_branch
          %2018 = sbr.rel (%p2016) target = $region60
        $region59: #{tpu_custom_call.1} parent=39 // pred_region
          %s2020 = ssub.s32 256, 256
          %2021 = vsyncadd %s2012, %s2020
          %s2022 = smul.addr %s25, 2
          %s2023 = smul.addr %s2022, 128
          %s2024 = scalar_lea.hbm %s5, %s2023
          %s2025 = sshll.u32 %s2015, 4
          %s2026 = int_to_ptr.vmem [resolvable:$true] %s2025
          %2031 = dma.vmem_to_hbm [thread:$0]  %s2026, 256, %s2024, %s2012, 128, 128, 8
        $region60: #{tpu_custom_call.1} parent=39 // pred_fallthru
          _
      $region40: #{tpu_custom_call.1} parent=5 // pred_fallthru
        _
      %p2032 = scmp.le.s32.totalorder 2, %s20
      // Predicated region
      $region61: #{tpu_custom_call.1} parent=5 // pred_check
        %p2033 = pneg %p2032
      $region62: #{tpu_custom_call.1} parent=5 // pred_check_branch
        %2035 = sbr.rel (%p2033) target = $region64
      $region63: #{tpu_custom_call.1} parent=5 // pred_region
        %s2036 = ssub.s32 %s20, 2
        // Predicated region
        $region65: #{tpu_custom_call.1} parent=63 // pred_check
          %p2037 = pneg %p159
        $region66: #{tpu_custom_call.1} parent=63 // pred_check_branch
          %2039 = sbr.rel (%p2037) target = $region68
        $region67: #{tpu_custom_call.1} parent=63 // pred_region
          %s2040 = sand.u32 %s144, 1
          %s2041 = scalar_lea.sflag [#allocation7], %s2040
          %s2042 = sand.u32 %s144, 1
          %s2043 = smul.addr %s2042, 16
          %s2044 = scalar_lea.vmem [#allocation13], %s2043
          %2045 = dma.done %s2041, 256
        $region68: #{tpu_custom_call.1} parent=63 // pred_fallthru
          _
      $region64: #{tpu_custom_call.1} parent=5 // pred_fallthru
        _
    $region6: #{tpu_custom_call.1} parent=1 // loop_footer
      %s24 = sadd.s32 1, %s20
    $region7: #{tpu_custom_call.1} parent=1 // loop_footer_branch
      %19 = sbr.rel target = $region3
    $region8: #{tpu_custom_call.1} parent=1 // loop_exit
      _
    %2046 = vsyncpa [#allocation6], 1
    %s2047 = scalar_lea.sflag [#allocation6], 1
    %2048 = vsyncpa %s2047, 1
    %2049 = vsyncpa [#allocation7], 1
    %s2050 = scalar_lea.sflag [#allocation7], 1
    %2051 = vsyncpa %s2050, 1
    %2052 = vsyncpa [#allocation8], 1
    %s2053 = scalar_lea.sflag [#allocation8], 1
    %2054 = vsyncpa %s2053, 1
    %2055 = vsyncpa [#allocation11], 1

</llo_original>
